<compile_context>
chip_gen: v6e
topology: v6e:2x2x1
jax: 0.10.0
libtpu: 0.0.40
codegen_flags: <defaults>
</compile_context>

<pallas_src>
import functools

import jax
import jax.numpy as jnp
from jax.experimental import pallas as pl
from jax.experimental.pallas import tpu as pltpu


def gru_mlp_kernel(T, B, H,
                   x_ref, wi_ref, bi_ref, wh_ref, bhn_ref,
                   w1_ref, b1_ref, w2_ref, b2_ref, w3_ref, b3_ref,
                   y_ref, h_buf):
    # ---- Batched input projection for all T*B rows (hoisted out of loop) ----
    #   x_proj[:, 0:H]   = x @ W_ir^T + (b_ir + b_hr)
    #   x_proj[:, H:2H]  = x @ W_iz^T + (b_iz + b_hz)
    #   x_proj[:, 2H:3H] = x @ W_in^T +  b_in
    x_proj = (jnp.dot(x_ref[...], wi_ref[...],
                      preferred_element_type=jnp.float32) + bi_ref[...])

    wh = wh_ref[...]      # (H, 3H) fused recurrent weight [Whr | Whz | Whn]
    bhn = bhn_ref[...]    # (1, H)  stays inside the r * (...) term (PyTorch GRU)

    h = jnp.zeros((B, H), jnp.float32)
    # Fully unrolled serial recurrence: T is small and static.
    for t in range(T):
        xp = x_proj[t * B:(t + 1) * B, :]                         # (B, 3H)
        hp = jnp.dot(h, wh, preferred_element_type=jnp.float32)   # (B, 3H)
        r = jax.nn.sigmoid(xp[:, 0:H] + hp[:, 0:H])
        z = jax.nn.sigmoid(xp[:, H:2 * H] + hp[:, H:2 * H])
        n = jnp.tanh(xp[:, 2 * H:3 * H] + r * (hp[:, 2 * H:3 * H] + bhn))
        h = (1.0 - z) * n + z * h
        h_buf[t * B:(t + 1) * B, :] = h

    # ---- 3-layer MLP over all time steps at once (batched matmuls) ----
    g = h_buf[...]                                                # (T*B, H)
    h1 = jnp.maximum(
        jnp.dot(g, w1_ref[...], preferred_element_type=jnp.float32) + b1_ref[...], 0.0)
    h2 = jnp.maximum(
        jnp.dot(h1, w2_ref[...], preferred_element_type=jnp.float32) + b2_ref[...], 0.0)
    out = jnp.dot(h2, w3_ref[...], preferred_element_type=jnp.float32) + b3_ref[...]
    y_ref[...] = out.astype(y_ref.dtype)      # single output write


def wind_speed_gru(x, params):
    """x: (B, T, input_dim) batch_first, float32. Returns (B, T, output_dim)."""
    B, T, input_dim = x.shape
    H = params["w_hr"].shape[0]
    out_dim = params["fc3_w"].shape[0]

    # Time-major rows: row t*B + b == x[b, t, :]
    x_flat = jnp.transpose(x, (1, 0, 2)).reshape(T * B, input_dim).astype(jnp.float32)

    # Fused weights / pre-summed biases (done once, wrapper-side, off the
    # kernel's critical path).
    w_i = jnp.concatenate(
        [params["w_ir"].T, params["w_iz"].T, params["w_in"].T], axis=1)   # (in, 3H)
    b_i = jnp.concatenate(
        [params["b_ir"] + params["b_hr"],
         params["b_iz"] + params["b_hz"],
         params["b_in"]])[None, :]                                        # (1, 3H)
    w_h = jnp.concatenate(
        [params["w_hr"].T, params["w_hz"].T, params["w_hn"].T], axis=1)   # (H, 3H)
    b_hn = params["b_hn"][None, :]                                        # (1, H)

    args = (
        x_flat, w_i, b_i, w_h, b_hn,
        params["fc1_w"].T, params["fc1_b"][None, :],
        params["fc2_w"].T, params["fc2_b"][None, :],
        params["fc3_w"].T, params["fc3_b"][None, :],
    )

    kernel = functools.partial(gru_mlp_kernel, T, B, H)

    y_flat = pl.pallas_call(
        kernel,
        out_shape=jax.ShapeDtypeStruct((T * B, out_dim), jnp.float32),
        in_specs=[pl.BlockSpec(memory_space=pltpu.MemorySpace.VMEM)] * len(args),
        out_specs=pl.BlockSpec(memory_space=pltpu.MemorySpace.VMEM),
        scratch_shapes=[pltpu.VMEM((T * B, H), jnp.float32)],
    )(*args)

    return jnp.transpose(y_flat.reshape(T, B, out_dim), (1, 0, 2))


def ref_forward(x, params):
    """Pure-JAX reference of the PyTorch forward (for correctness check)."""
    B = x.shape[0]
    H = params["w_hr"].shape[0]

    def step(h, x_t):
        r = jax.nn.sigmoid(x_t @ params["w_ir"].T + params["b_ir"]
                           + h @ params["w_hr"].T + params["b_hr"])
        z = jax.nn.sigmoid(x_t @ params["w_iz"].T + params["b_iz"]
                           + h @ params["w_hz"].T + params["b_hz"])
        n = jnp.tanh(x_t @ params["w_in"].T + params["b_in"]
                     + r * (h @ params["w_hn"].T + params["b_hn"]))
        h_new = (1.0 - z) * n + z * h
        return h_new, h_new

    h0 = jnp.zeros((B, H), jnp.float32)
    _, hs = jax.lax.scan(step, h0, jnp.transpose(x, (1, 0, 2)))
    g = jnp.transpose(hs, (1, 0, 2))  # (B, T, H)
    h1 = jnp.maximum(g @ params["fc1_w"].T + params["fc1_b"], 0.0)
    h2 = jnp.maximum(h1 @ params["fc2_w"].T + params["fc2_b"], 0.0)
    return h2 @ params["fc3_w"].T + params["fc3_b"]


def init_params(key, input_dim, hidden_dim, output_dim, time_flag):
    H = hidden_dim
    f0 = H * time_flag
    f1 = f0 // 2
    f2 = f0 // 4
    ks = jax.random.split(key, 18)

    def u(k, shape, bound):
        return jax.random.uniform(k, shape, jnp.float32, -bound, bound)

    kg = 1.0 / jnp.sqrt(H)
    p = {
        # GRU weights (PyTorch orientation: (H, in_features))
        "w_ir": u(ks[0], (H, input_dim), kg), "w_iz": u(ks[1], (H, input_dim), kg),
        "w_in": u(ks[2], (H, input_dim), kg),
        "w_hr": u(ks[3], (H, H), kg), "w_hz": u(ks[4], (H, H), kg),
        "w_hn": u(ks[5], (H, H), kg),
        "b_ir": u(ks[6], (H,), kg), "b_iz": u(ks[7], (H,), kg), "b_in": u(ks[8], (H,), kg),
        "b_hr": u(ks[9], (H,), kg), "b_hz": u(ks[10], (H,), kg), "b_hn": u(ks[11], (H,), kg),
        # fc layers (PyTorch orientation: (out_features, in_features))
        "fc1_w": u(ks[12], (f1, f0), 1.0 / jnp.sqrt(f0)),
        "fc1_b": u(ks[13], (f1,), 1.0 / jnp.sqrt(f0)),
        "fc2_w": u(ks[14], (f2, f1), 1.0 / jnp.sqrt(f1)),
        "fc2_b": u(ks[15], (f2,), 1.0 / jnp.sqrt(f1)),
        "fc3_w": u(ks[16], (output_dim, f2), 1.0 / jnp.sqrt(f2)),
        "fc3_b": u(ks[17], (output_dim,), 1.0 / jnp.sqrt(f2)),
    }
    return p


if __name__ == "__main__":
    input_dim, hidden_dim, output_dim = 4, 32, 1
    num_layers, flag_bidirectional, time_flag = 1, False, 1
    B, T = 2, 8

    key = jax.random.PRNGKey(0)
    kp, kx = jax.random.split(key)
    params = init_params(kp, input_dim, hidden_dim, output_dim, time_flag)
    x = jax.random.normal(kx, (B, T, input_dim), jnp.float32)

    y = wind_speed_gru(x, params)
    y = jax.block_until_ready(y)

    y_ref = ref_forward(x, params)
    assert y.shape == (B, T, output_dim), y.shape
    assert jnp.allclose(y, y_ref, atol=1e-4, rtol=1e-4), float(jnp.max(jnp.abs(y - y_ref)))

    print("KERNEL_OK")
</pallas_src>

<mosaic_0001>
module attributes {stable_mosaic.version = 11 : i64} {
  func.func @gru_mlp_kernel(%arg0: memref<16x4xf32, #tpu.memory_space<vmem>>, %arg1: memref<4x96xf32, #tpu.memory_space<vmem>>, %arg2: memref<1x96xf32, #tpu.memory_space<vmem>>, %arg3: memref<32x96xf32, #tpu.memory_space<vmem>>, %arg4: memref<1x32xf32, #tpu.memory_space<vmem>>, %arg5: memref<32x16xf32, #tpu.memory_space<vmem>>, %arg6: memref<1x16xf32, #tpu.memory_space<vmem>>, %arg7: memref<16x8xf32, #tpu.memory_space<vmem>>, %arg8: memref<1x8xf32, #tpu.memory_space<vmem>>, %arg9: memref<8x1xf32, #tpu.memory_space<vmem>>, %arg10: memref<1x1xf32, #tpu.memory_space<vmem>>, %arg11: memref<16x1xf32, #tpu.memory_space<vmem>>, %arg12: memref<16x32xf32, #tpu.memory_space<vmem>>) attributes {dimension_semantics = [], scalar_prefetch = 0 : i64, scratch_operands = 1 : i64, tpu.core_type = #tpu.core_type<tc>} {
    %c0 = arith.constant 0 : index
    %c0_0 = arith.constant 0 : index
    %0 = vector.load %arg0[%c0, %c0_0] : memref<16x4xf32, #tpu.memory_space<vmem>>, vector<16x4xf32>
    %c0_1 = arith.constant 0 : index
    %c0_2 = arith.constant 0 : index
    %1 = vector.load %arg1[%c0_1, %c0_2] : memref<4x96xf32, #tpu.memory_space<vmem>>, vector<4x96xf32>
    %cst = arith.constant dense<0.000000e+00> : vector<16x96xf32>
    %2 = tpu.matmul %0, %1, %cst {dimension_numbers = #tpu.dot_dimension_numbers<[1], [0], [0], [1], [0, 0, 1, 1], [], []>} : vector<16x4xf32>, vector<4x96xf32>, vector<16x96xf32> -> vector<16x96xf32>
    %c0_3 = arith.constant 0 : index
    %c0_4 = arith.constant 0 : index
    %3 = vector.load %arg2[%c0_3, %c0_4] : memref<1x96xf32, #tpu.memory_space<vmem>>, vector<1x96xf32>
    %4 = vector.broadcast %3 : vector<1x96xf32> to vector<16x96xf32>
    %5 = arith.addf %2, %4 : vector<16x96xf32>
    %c0_5 = arith.constant 0 : index
    %c0_6 = arith.constant 0 : index
    %6 = vector.load %arg3[%c0_5, %c0_6] : memref<32x96xf32, #tpu.memory_space<vmem>>, vector<32x96xf32>
    %c0_7 = arith.constant 0 : index
    %c0_8 = arith.constant 0 : index
    %7 = vector.load %arg4[%c0_7, %c0_8] : memref<1x32xf32, #tpu.memory_space<vmem>>, vector<1x32xf32>
    %cst_9 = arith.constant 0.000000e+00 : f32
    %8 = vector.broadcast %cst_9 : f32 to vector<2x32xf32>
    %9 = vector.extract_strided_slice %5 {offsets = [0, 0], sizes = [2, 96], strides = [1, 1]} : vector<16x96xf32> to vector<2x96xf32>
    %cst_10 = arith.constant dense<0.000000e+00> : vector<2x96xf32>
    %10 = tpu.matmul %8, %6, %cst_10 {dimension_numbers = #tpu.dot_dimension_numbers<[1], [0], [0], [1], [0, 0, 1, 1], [], []>} : vector<2x32xf32>, vector<32x96xf32>, vector<2x96xf32> -> vector<2x96xf32>
    %11 = vector.extract_strided_slice %9 {offsets = [0, 0], sizes = [2, 32], strides = [1, 1]} : vector<2x96xf32> to vector<2x32xf32>
    %12 = vector.extract_strided_slice %10 {offsets = [0, 0], sizes = [2, 32], strides = [1, 1]} : vector<2x96xf32> to vector<2x32xf32>
    %13 = arith.addf %11, %12 : vector<2x32xf32>
    %14 = arith.negf %13 : vector<2x32xf32>
    %15 = math.exp %14 : vector<2x32xf32>
    %cst_11 = arith.constant 1.000000e+00 : f32
    %16 = vector.broadcast %cst_11 : f32 to vector<2x32xf32>
    %17 = arith.addf %16, %15 : vector<2x32xf32>
    %18 = arith.divf %16, %17 : vector<2x32xf32>
    %19 = vector.extract_strided_slice %9 {offsets = [0, 32], sizes = [2, 32], strides = [1, 1]} : vector<2x96xf32> to vector<2x32xf32>
    %20 = vector.extract_strided_slice %10 {offsets = [0, 32], sizes = [2, 32], strides = [1, 1]} : vector<2x96xf32> to vector<2x32xf32>
    %21 = arith.addf %19, %20 : vector<2x32xf32>
    %22 = arith.negf %21 : vector<2x32xf32>
    %23 = math.exp %22 : vector<2x32xf32>
    %cst_12 = arith.constant 1.000000e+00 : f32
    %24 = vector.broadcast %cst_12 : f32 to vector<2x32xf32>
    %25 = arith.addf %24, %23 : vector<2x32xf32>
    %26 = arith.divf %24, %25 : vector<2x32xf32>
    %27 = vector.extract_strided_slice %9 {offsets = [0, 64], sizes = [2, 32], strides = [1, 1]} : vector<2x96xf32> to vector<2x32xf32>
    %28 = vector.extract_strided_slice %10 {offsets = [0, 64], sizes = [2, 32], strides = [1, 1]} : vector<2x96xf32> to vector<2x32xf32>
    %29 = vector.broadcast %7 : vector<1x32xf32> to vector<2x32xf32>
    %30 = arith.addf %28, %29 : vector<2x32xf32>
    %31 = arith.mulf %18, %30 : vector<2x32xf32>
    %32 = arith.addf %27, %31 : vector<2x32xf32>
    %33 = math.tanh %32 : vector<2x32xf32>
    %cst_13 = arith.constant 1.000000e+00 : f32
    %34 = vector.broadcast %cst_13 : f32 to vector<2x32xf32>
    %35 = arith.subf %34, %26 : vector<2x32xf32>
    %36 = arith.mulf %35, %33 : vector<2x32xf32>
    %37 = arith.mulf %26, %8 : vector<2x32xf32>
    %38 = arith.addf %36, %37 : vector<2x32xf32>
    %c0_14 = arith.constant 0 : index
    %c0_15 = arith.constant 0 : index
    %39 = vector.load %arg12[%c0_14, %c0_15] : memref<16x32xf32, #tpu.memory_space<vmem>>, vector<2x32xf32>
    tpu.vector_store %arg12[%c0_14, %c0_15], %38 {strides = array<i32>} : memref<16x32xf32, #tpu.memory_space<vmem>>, vector<2x32xf32>,
    %40 = vector.extract_strided_slice %5 {offsets = [2, 0], sizes = [2, 96], strides = [1, 1]} : vector<16x96xf32> to vector<2x96xf32>
    %cst_16 = arith.constant dense<0.000000e+00> : vector<2x96xf32>
    %41 = tpu.matmul %38, %6, %cst_16 {dimension_numbers = #tpu.dot_dimension_numbers<[1], [0], [0], [1], [0, 0, 1, 1], [], []>} : vector<2x32xf32>, vector<32x96xf32>, vector<2x96xf32> -> vector<2x96xf32>
    %42 = vector.extract_strided_slice %40 {offsets = [0, 0], sizes = [2, 32], strides = [1, 1]} : vector<2x96xf32> to vector<2x32xf32>
    %43 = vector.extract_strided_slice %41 {offsets = [0, 0], sizes = [2, 32], strides = [1, 1]} : vector<2x96xf32> to vector<2x32xf32>
    %44 = arith.addf %42, %43 : vector<2x32xf32>
    %45 = arith.negf %44 : vector<2x32xf32>
    %46 = math.exp %45 : vector<2x32xf32>
    %cst_17 = arith.constant 1.000000e+00 : f32
    %47 = vector.broadcast %cst_17 : f32 to vector<2x32xf32>
    %48 = arith.addf %47, %46 : vector<2x32xf32>
    %49 = arith.divf %47, %48 : vector<2x32xf32>
    %50 = vector.extract_strided_slice %40 {offsets = [0, 32], sizes = [2, 32], strides = [1, 1]} : vector<2x96xf32> to vector<2x32xf32>
    %51 = vector.extract_strided_slice %41 {offsets = [0, 32], sizes = [2, 32], strides = [1, 1]} : vector<2x96xf32> to vector<2x32xf32>
    %52 = arith.addf %50, %51 : vector<2x32xf32>
    %53 = arith.negf %52 : vector<2x32xf32>
    %54 = math.exp %53 : vector<2x32xf32>
    %cst_18 = arith.constant 1.000000e+00 : f32
    %55 = vector.broadcast %cst_18 : f32 to vector<2x32xf32>
    %56 = arith.addf %55, %54 : vector<2x32xf32>
    %57 = arith.divf %55, %56 : vector<2x32xf32>
    %58 = vector.extract_strided_slice %40 {offsets = [0, 64], sizes = [2, 32], strides = [1, 1]} : vector<2x96xf32> to vector<2x32xf32>
    %59 = vector.extract_strided_slice %41 {offsets = [0, 64], sizes = [2, 32], strides = [1, 1]} : vector<2x96xf32> to vector<2x32xf32>
    %60 = vector.broadcast %7 : vector<1x32xf32> to vector<2x32xf32>
    %61 = arith.addf %59, %60 : vector<2x32xf32>
    %62 = arith.mulf %49, %61 : vector<2x32xf32>
    %63 = arith.addf %58, %62 : vector<2x32xf32>
    %64 = math.tanh %63 : vector<2x32xf32>
    %cst_19 = arith.constant 1.000000e+00 : f32
    %65 = vector.broadcast %cst_19 : f32 to vector<2x32xf32>
    %66 = arith.subf %65, %57 : vector<2x32xf32>
    %67 = arith.mulf %66, %64 : vector<2x32xf32>
    %68 = arith.mulf %57, %38 : vector<2x32xf32>
    %69 = arith.addf %67, %68 : vector<2x32xf32>
    %c2 = arith.constant 2 : index
    %c0_20 = arith.constant 0 : index
    %70 = vector.load %arg12[%c2, %c0_20] : memref<16x32xf32, #tpu.memory_space<vmem>>, vector<2x32xf32>
    tpu.vector_store %arg12[%c2, %c0_20], %69 {strides = array<i32>} : memref<16x32xf32, #tpu.memory_space<vmem>>, vector<2x32xf32>,
    %71 = vector.extract_strided_slice %5 {offsets = [4, 0], sizes = [2, 96], strides = [1, 1]} : vector<16x96xf32> to vector<2x96xf32>
    %cst_21 = arith.constant dense<0.000000e+00> : vector<2x96xf32>
    %72 = tpu.matmul %69, %6, %cst_21 {dimension_numbers = #tpu.dot_dimension_numbers<[1], [0], [0], [1], [0, 0, 1, 1], [], []>} : vector<2x32xf32>, vector<32x96xf32>, vector<2x96xf32> -> vector<2x96xf32>
    %73 = vector.extract_strided_slice %71 {offsets = [0, 0], sizes = [2, 32], strides = [1, 1]} : vector<2x96xf32> to vector<2x32xf32>
    %74 = vector.extract_strided_slice %72 {offsets = [0, 0], sizes = [2, 32], strides = [1, 1]} : vector<2x96xf32> to vector<2x32xf32>
    %75 = arith.addf %73, %74 : vector<2x32xf32>
    %76 = arith.negf %75 : vector<2x32xf32>
    %77 = math.exp %76 : vector<2x32xf32>
    %cst_22 = arith.constant 1.000000e+00 : f32
    %78 = vector.broadcast %cst_22 : f32 to vector<2x32xf32>
    %79 = arith.addf %78, %77 : vector<2x32xf32>
    %80 = arith.divf %78, %79 : vector<2x32xf32>
    %81 = vector.extract_strided_slice %71 {offsets = [0, 32], sizes = [2, 32], strides = [1, 1]} : vector<2x96xf32> to vector<2x32xf32>
    %82 = vector.extract_strided_slice %72 {offsets = [0, 32], sizes = [2, 32], strides = [1, 1]} : vector<2x96xf32> to vector<2x32xf32>
    %83 = arith.addf %81, %82 : vector<2x32xf32>
    %84 = arith.negf %83 : vector<2x32xf32>
    %85 = math.exp %84 : vector<2x32xf32>
    %cst_23 = arith.constant 1.000000e+00 : f32
    %86 = vector.broadcast %cst_23 : f32 to vector<2x32xf32>
    %87 = arith.addf %86, %85 : vector<2x32xf32>
    %88 = arith.divf %86, %87 : vector<2x32xf32>
    %89 = vector.extract_strided_slice %71 {offsets = [0, 64], sizes = [2, 32], strides = [1, 1]} : vector<2x96xf32> to vector<2x32xf32>
    %90 = vector.extract_strided_slice %72 {offsets = [0, 64], sizes = [2, 32], strides = [1, 1]} : vector<2x96xf32> to vector<2x32xf32>
    %91 = vector.broadcast %7 : vector<1x32xf32> to vector<2x32xf32>
    %92 = arith.addf %90, %91 : vector<2x32xf32>
    %93 = arith.mulf %80, %92 : vector<2x32xf32>
    %94 = arith.addf %89, %93 : vector<2x32xf32>
    %95 = math.tanh %94 : vector<2x32xf32>
    %cst_24 = arith.constant 1.000000e+00 : f32
    %96 = vector.broadcast %cst_24 : f32 to vector<2x32xf32>
    %97 = arith.subf %96, %88 : vector<2x32xf32>
    %98 = arith.mulf %97, %95 : vector<2x32xf32>
    %99 = arith.mulf %88, %69 : vector<2x32xf32>
    %100 = arith.addf %98, %99 : vector<2x32xf32>
    %c4 = arith.constant 4 : index
    %c0_25 = arith.constant 0 : index
    %101 = vector.load %arg12[%c4, %c0_25] : memref<16x32xf32, #tpu.memory_space<vmem>>, vector<2x32xf32>
    tpu.vector_store %arg12[%c4, %c0_25], %100 {strides = array<i32>} : memref<16x32xf32, #tpu.memory_space<vmem>>, vector<2x32xf32>,
    %102 = vector.extract_strided_slice %5 {offsets = [6, 0], sizes = [2, 96], strides = [1, 1]} : vector<16x96xf32> to vector<2x96xf32>
    %cst_26 = arith.constant dense<0.000000e+00> : vector<2x96xf32>
    %103 = tpu.matmul %100, %6, %cst_26 {dimension_numbers = #tpu.dot_dimension_numbers<[1], [0], [0], [1], [0, 0, 1, 1], [], []>} : vector<2x32xf32>, vector<32x96xf32>, vector<2x96xf32> -> vector<2x96xf32>
    %104 = vector.extract_strided_slice %102 {offsets = [0, 0], sizes = [2, 32], strides = [1, 1]} : vector<2x96xf32> to vector<2x32xf32>
    %105 = vector.extract_strided_slice %103 {offsets = [0, 0], sizes = [2, 32], strides = [1, 1]} : vector<2x96xf32> to vector<2x32xf32>
    %106 = arith.addf %104, %105 : vector<2x32xf32>
    %107 = arith.negf %106 : vector<2x32xf32>
    %108 = math.exp %107 : vector<2x32xf32>
    %cst_27 = arith.constant 1.000000e+00 : f32
    %109 = vector.broadcast %cst_27 : f32 to vector<2x32xf32>
    %110 = arith.addf %109, %108 : vector<2x32xf32>
    %111 = arith.divf %109, %110 : vector<2x32xf32>
    %112 = vector.extract_strided_slice %102 {offsets = [0, 32], sizes = [2, 32], strides = [1, 1]} : vector<2x96xf32> to vector<2x32xf32>
    %113 = vector.extract_strided_slice %103 {offsets = [0, 32], sizes = [2, 32], strides = [1, 1]} : vector<2x96xf32> to vector<2x32xf32>
    %114 = arith.addf %112, %113 : vector<2x32xf32>
    %115 = arith.negf %114 : vector<2x32xf32>
    %116 = math.exp %115 : vector<2x32xf32>
    %cst_28 = arith.constant 1.000000e+00 : f32
    %117 = vector.broadcast %cst_28 : f32 to vector<2x32xf32>
    %118 = arith.addf %117, %116 : vector<2x32xf32>
    %119 = arith.divf %117, %118 : vector<2x32xf32>
    %120 = vector.extract_strided_slice %102 {offsets = [0, 64], sizes = [2, 32], strides = [1, 1]} : vector<2x96xf32> to vector<2x32xf32>
    %121 = vector.extract_strided_slice %103 {offsets = [0, 64], sizes = [2, 32], strides = [1, 1]} : vector<2x96xf32> to vector<2x32xf32>
    %122 = vector.broadcast %7 : vector<1x32xf32> to vector<2x32xf32>
    %123 = arith.addf %121, %122 : vector<2x32xf32>
    %124 = arith.mulf %111, %123 : vector<2x32xf32>
    %125 = arith.addf %120, %124 : vector<2x32xf32>
    %126 = math.tanh %125 : vector<2x32xf32>
    %cst_29 = arith.constant 1.000000e+00 : f32
    %127 = vector.broadcast %cst_29 : f32 to vector<2x32xf32>
    %128 = arith.subf %127, %119 : vector<2x32xf32>
    %129 = arith.mulf %128, %126 : vector<2x32xf32>
    %130 = arith.mulf %119, %100 : vector<2x32xf32>
    %131 = arith.addf %129, %130 : vector<2x32xf32>
    %c6 = arith.constant 6 : index
    %c0_30 = arith.constant 0 : index
    %132 = vector.load %arg12[%c6, %c0_30] : memref<16x32xf32, #tpu.memory_space<vmem>>, vector<2x32xf32>
    tpu.vector_store %arg12[%c6, %c0_30], %131 {strides = array<i32>} : memref<16x32xf32, #tpu.memory_space<vmem>>, vector<2x32xf32>,
    %133 = vector.extract_strided_slice %5 {offsets = [8, 0], sizes = [2, 96], strides = [1, 1]} : vector<16x96xf32> to vector<2x96xf32>
    %cst_31 = arith.constant dense<0.000000e+00> : vector<2x96xf32>
    %134 = tpu.matmul %131, %6, %cst_31 {dimension_numbers = #tpu.dot_dimension_numbers<[1], [0], [0], [1], [0, 0, 1, 1], [], []>} : vector<2x32xf32>, vector<32x96xf32>, vector<2x96xf32> -> vector<2x96xf32>
    %135 = vector.extract_strided_slice %133 {offsets = [0, 0], sizes = [2, 32], strides = [1, 1]} : vector<2x96xf32> to vector<2x32xf32>
    %136 = vector.extract_strided_slice %134 {offsets = [0, 0], sizes = [2, 32], strides = [1, 1]} : vector<2x96xf32> to vector<2x32xf32>
    %137 = arith.addf %135, %136 : vector<2x32xf32>
    %138 = arith.negf %137 : vector<2x32xf32>
    %139 = math.exp %138 : vector<2x32xf32>
    %cst_32 = arith.constant 1.000000e+00 : f32
    %140 = vector.broadcast %cst_32 : f32 to vector<2x32xf32>
    %141 = arith.addf %140, %139 : vector<2x32xf32>
    %142 = arith.divf %140, %141 : vector<2x32xf32>
    %143 = vector.extract_strided_slice %133 {offsets = [0, 32], sizes = [2, 32], strides = [1, 1]} : vector<2x96xf32> to vector<2x32xf32>
    %144 = vector.extract_strided_slice %134 {offsets = [0, 32], sizes = [2, 32], strides = [1, 1]} : vector<2x96xf32> to vector<2x32xf32>
    %145 = arith.addf %143, %144 : vector<2x32xf32>
    %146 = arith.negf %145 : vector<2x32xf32>
    %147 = math.exp %146 : vector<2x32xf32>
    %cst_33 = arith.constant 1.000000e+00 : f32
    %148 = vector.broadcast %cst_33 : f32 to vector<2x32xf32>
    %149 = arith.addf %148, %147 : vector<2x32xf32>
    %150 = arith.divf %148, %149 : vector<2x32xf32>
    %151 = vector.extract_strided_slice %133 {offsets = [0, 64], sizes = [2, 32], strides = [1, 1]} : vector<2x96xf32> to vector<2x32xf32>
    %152 = vector.extract_strided_slice %134 {offsets = [0, 64], sizes = [2, 32], strides = [1, 1]} : vector<2x96xf32> to vector<2x32xf32>
    %153 = vector.broadcast %7 : vector<1x32xf32> to vector<2x32xf32>
    %154 = arith.addf %152, %153 : vector<2x32xf32>
    %155 = arith.mulf %142, %154 : vector<2x32xf32>
    %156 = arith.addf %151, %155 : vector<2x32xf32>
    %157 = math.tanh %156 : vector<2x32xf32>
    %cst_34 = arith.constant 1.000000e+00 : f32
    %158 = vector.broadcast %cst_34 : f32 to vector<2x32xf32>
    %159 = arith.subf %158, %150 : vector<2x32xf32>
    %160 = arith.mulf %159, %157 : vector<2x32xf32>
    %161 = arith.mulf %150, %131 : vector<2x32xf32>
    %162 = arith.addf %160, %161 : vector<2x32xf32>
    %c8 = arith.constant 8 : index
    %c0_35 = arith.constant 0 : index
    %163 = vector.load %arg12[%c8, %c0_35] : memref<16x32xf32, #tpu.memory_space<vmem>>, vector<2x32xf32>
    tpu.vector_store %arg12[%c8, %c0_35], %162 {strides = array<i32>} : memref<16x32xf32, #tpu.memory_space<vmem>>, vector<2x32xf32>,
    %164 = vector.extract_strided_slice %5 {offsets = [10, 0], sizes = [2, 96], strides = [1, 1]} : vector<16x96xf32> to vector<2x96xf32>
    %cst_36 = arith.constant dense<0.000000e+00> : vector<2x96xf32>
    %165 = tpu.matmul %162, %6, %cst_36 {dimension_numbers = #tpu.dot_dimension_numbers<[1], [0], [0], [1], [0, 0, 1, 1], [], []>} : vector<2x32xf32>, vector<32x96xf32>, vector<2x96xf32> -> vector<2x96xf32>
    %166 = vector.extract_strided_slice %164 {offsets = [0, 0], sizes = [2, 32], strides = [1, 1]} : vector<2x96xf32> to vector<2x32xf32>
    %167 = vector.extract_strided_slice %165 {offsets = [0, 0], sizes = [2, 32], strides = [1, 1]} : vector<2x96xf32> to vector<2x32xf32>
    %168 = arith.addf %166, %167 : vector<2x32xf32>
    %169 = arith.negf %168 : vector<2x32xf32>
    %170 = math.exp %169 : vector<2x32xf32>
    %cst_37 = arith.constant 1.000000e+00 : f32
    %171 = vector.broadcast %cst_37 : f32 to vector<2x32xf32>
    %172 = arith.addf %171, %170 : vector<2x32xf32>
    %173 = arith.divf %171, %172 : vector<2x32xf32>
    %174 = vector.extract_strided_slice %164 {offsets = [0, 32], sizes = [2, 32], strides = [1, 1]} : vector<2x96xf32> to vector<2x32xf32>
    %175 = vector.extract_strided_slice %165 {offsets = [0, 32], sizes = [2, 32], strides = [1, 1]} : vector<2x96xf32> to vector<2x32xf32>
    %176 = arith.addf %174, %175 : vector<2x32xf32>
    %177 = arith.negf %176 : vector<2x32xf32>
    %178 = math.exp %177 : vector<2x32xf32>
    %cst_38 = arith.constant 1.000000e+00 : f32
    %179 = vector.broadcast %cst_38 : f32 to vector<2x32xf32>
    %180 = arith.addf %179, %178 : vector<2x32xf32>
    %181 = arith.divf %179, %180 : vector<2x32xf32>
    %182 = vector.extract_strided_slice %164 {offsets = [0, 64], sizes = [2, 32], strides = [1, 1]} : vector<2x96xf32> to vector<2x32xf32>
    %183 = vector.extract_strided_slice %165 {offsets = [0, 64], sizes = [2, 32], strides = [1, 1]} : vector<2x96xf32> to vector<2x32xf32>
    %184 = vector.broadcast %7 : vector<1x32xf32> to vector<2x32xf32>
    %185 = arith.addf %183, %184 : vector<2x32xf32>
    %186 = arith.mulf %173, %185 : vector<2x32xf32>
    %187 = arith.addf %182, %186 : vector<2x32xf32>
    %188 = math.tanh %187 : vector<2x32xf32>
    %cst_39 = arith.constant 1.000000e+00 : f32
    %189 = vector.broadcast %cst_39 : f32 to vector<2x32xf32>
    %190 = arith.subf %189, %181 : vector<2x32xf32>
    %191 = arith.mulf %190, %188 : vector<2x32xf32>
    %192 = arith.mulf %181, %162 : vector<2x32xf32>
    %193 = arith.addf %191, %192 : vector<2x32xf32>
    %c10 = arith.constant 10 : index
    %c0_40 = arith.constant 0 : index
    %194 = vector.load %arg12[%c10, %c0_40] : memref<16x32xf32, #tpu.memory_space<vmem>>, vector<2x32xf32>
    tpu.vector_store %arg12[%c10, %c0_40], %193 {strides = array<i32>} : memref<16x32xf32, #tpu.memory_space<vmem>>, vector<2x32xf32>,
    %195 = vector.extract_strided_slice %5 {offsets = [12, 0], sizes = [2, 96], strides = [1, 1]} : vector<16x96xf32> to vector<2x96xf32>
    %cst_41 = arith.constant dense<0.000000e+00> : vector<2x96xf32>
    %196 = tpu.matmul %193, %6, %cst_41 {dimension_numbers = #tpu.dot_dimension_numbers<[1], [0], [0], [1], [0, 0, 1, 1], [], []>} : vector<2x32xf32>, vector<32x96xf32>, vector<2x96xf32> -> vector<2x96xf32>
    %197 = vector.extract_strided_slice %195 {offsets = [0, 0], sizes = [2, 32], strides = [1, 1]} : vector<2x96xf32> to vector<2x32xf32>
    %198 = vector.extract_strided_slice %196 {offsets = [0, 0], sizes = [2, 32], strides = [1, 1]} : vector<2x96xf32> to vector<2x32xf32>
    %199 = arith.addf %197, %198 : vector<2x32xf32>
    %200 = arith.negf %199 : vector<2x32xf32>
    %201 = math.exp %200 : vector<2x32xf32>
    %cst_42 = arith.constant 1.000000e+00 : f32
    %202 = vector.broadcast %cst_42 : f32 to vector<2x32xf32>
    %203 = arith.addf %202, %201 : vector<2x32xf32>
    %204 = arith.divf %202, %203 : vector<2x32xf32>
    %205 = vector.extract_strided_slice %195 {offsets = [0, 32], sizes = [2, 32], strides = [1, 1]} : vector<2x96xf32> to vector<2x32xf32>
    %206 = vector.extract_strided_slice %196 {offsets = [0, 32], sizes = [2, 32], strides = [1, 1]} : vector<2x96xf32> to vector<2x32xf32>
    %207 = arith.addf %205, %206 : vector<2x32xf32>
    %208 = arith.negf %207 : vector<2x32xf32>
    %209 = math.exp %208 : vector<2x32xf32>
    %cst_43 = arith.constant 1.000000e+00 : f32
    %210 = vector.broadcast %cst_43 : f32 to vector<2x32xf32>
    %211 = arith.addf %210, %209 : vector<2x32xf32>
    %212 = arith.divf %210, %211 : vector<2x32xf32>
    %213 = vector.extract_strided_slice %195 {offsets = [0, 64], sizes = [2, 32], strides = [1, 1]} : vector<2x96xf32> to vector<2x32xf32>
    %214 = vector.extract_strided_slice %196 {offsets = [0, 64], sizes = [2, 32], strides = [1, 1]} : vector<2x96xf32> to vector<2x32xf32>
    %215 = vector.broadcast %7 : vector<1x32xf32> to vector<2x32xf32>
    %216 = arith.addf %214, %215 : vector<2x32xf32>
    %217 = arith.mulf %204, %216 : vector<2x32xf32>
    %218 = arith.addf %213, %217 : vector<2x32xf32>
    %219 = math.tanh %218 : vector<2x32xf32>
    %cst_44 = arith.constant 1.000000e+00 : f32
    %220 = vector.broadcast %cst_44 : f32 to vector<2x32xf32>
    %221 = arith.subf %220, %212 : vector<2x32xf32>
    %222 = arith.mulf %221, %219 : vector<2x32xf32>
    %223 = arith.mulf %212, %193 : vector<2x32xf32>
    %224 = arith.addf %222, %223 : vector<2x32xf32>
    %c12 = arith.constant 12 : index
    %c0_45 = arith.constant 0 : index
    %225 = vector.load %arg12[%c12, %c0_45] : memref<16x32xf32, #tpu.memory_space<vmem>>, vector<2x32xf32>
    tpu.vector_store %arg12[%c12, %c0_45], %224 {strides = array<i32>} : memref<16x32xf32, #tpu.memory_space<vmem>>, vector<2x32xf32>,
    %226 = vector.extract_strided_slice %5 {offsets = [14, 0], sizes = [2, 96], strides = [1, 1]} : vector<16x96xf32> to vector<2x96xf32>
    %cst_46 = arith.constant dense<0.000000e+00> : vector<2x96xf32>
    %227 = tpu.matmul %224, %6, %cst_46 {dimension_numbers = #tpu.dot_dimension_numbers<[1], [0], [0], [1], [0, 0, 1, 1], [], []>} : vector<2x32xf32>, vector<32x96xf32>, vector<2x96xf32> -> vector<2x96xf32>
    %228 = vector.extract_strided_slice %226 {offsets = [0, 0], sizes = [2, 32], strides = [1, 1]} : vector<2x96xf32> to vector<2x32xf32>
    %229 = vector.extract_strided_slice %227 {offsets = [0, 0], sizes = [2, 32], strides = [1, 1]} : vector<2x96xf32> to vector<2x32xf32>
    %230 = arith.addf %228, %229 : vector<2x32xf32>
    %231 = arith.negf %230 : vector<2x32xf32>
    %232 = math.exp %231 : vector<2x32xf32>
    %cst_47 = arith.constant 1.000000e+00 : f32
    %233 = vector.broadcast %cst_47 : f32 to vector<2x32xf32>
    %234 = arith.addf %233, %232 : vector<2x32xf32>
    %235 = arith.divf %233, %234 : vector<2x32xf32>
    %236 = vector.extract_strided_slice %226 {offsets = [0, 32], sizes = [2, 32], strides = [1, 1]} : vector<2x96xf32> to vector<2x32xf32>
    %237 = vector.extract_strided_slice %227 {offsets = [0, 32], sizes = [2, 32], strides = [1, 1]} : vector<2x96xf32> to vector<2x32xf32>
    %238 = arith.addf %236, %237 : vector<2x32xf32>
    %239 = arith.negf %238 : vector<2x32xf32>
    %240 = math.exp %239 : vector<2x32xf32>
    %cst_48 = arith.constant 1.000000e+00 : f32
    %241 = vector.broadcast %cst_48 : f32 to vector<2x32xf32>
    %242 = arith.addf %241, %240 : vector<2x32xf32>
    %243 = arith.divf %241, %242 : vector<2x32xf32>
    %244 = vector.extract_strided_slice %226 {offsets = [0, 64], sizes = [2, 32], strides = [1, 1]} : vector<2x96xf32> to vector<2x32xf32>
    %245 = vector.extract_strided_slice %227 {offsets = [0, 64], sizes = [2, 32], strides = [1, 1]} : vector<2x96xf32> to vector<2x32xf32>
    %246 = vector.broadcast %7 : vector<1x32xf32> to vector<2x32xf32>
    %247 = arith.addf %245, %246 : vector<2x32xf32>
    %248 = arith.mulf %235, %247 : vector<2x32xf32>
    %249 = arith.addf %244, %248 : vector<2x32xf32>
    %250 = math.tanh %249 : vector<2x32xf32>
    %cst_49 = arith.constant 1.000000e+00 : f32
    %251 = vector.broadcast %cst_49 : f32 to vector<2x32xf32>
    %252 = arith.subf %251, %243 : vector<2x32xf32>
    %253 = arith.mulf %252, %250 : vector<2x32xf32>
    %254 = arith.mulf %243, %224 : vector<2x32xf32>
    %255 = arith.addf %253, %254 : vector<2x32xf32>
    %c14 = arith.constant 14 : index
    %c0_50 = arith.constant 0 : index
    %256 = vector.load %arg12[%c14, %c0_50] : memref<16x32xf32, #tpu.memory_space<vmem>>, vector<2x32xf32>
    tpu.vector_store %arg12[%c14, %c0_50], %255 {strides = array<i32>} : memref<16x32xf32, #tpu.memory_space<vmem>>, vector<2x32xf32>,
    %c0_51 = arith.constant 0 : index
    %c0_52 = arith.constant 0 : index
    %257 = vector.load %arg12[%c0_51, %c0_52] : memref<16x32xf32, #tpu.memory_space<vmem>>, vector<16x32xf32>
    %c0_53 = arith.constant 0 : index
    %c0_54 = arith.constant 0 : index
    %258 = vector.load %arg5[%c0_53, %c0_54] : memref<32x16xf32, #tpu.memory_space<vmem>>, vector<32x16xf32>
    %cst_55 = arith.constant dense<0.000000e+00> : vector<16x16xf32>
    %259 = tpu.matmul %257, %258, %cst_55 {dimension_numbers = #tpu.dot_dimension_numbers<[1], [0], [0], [1], [0, 0, 1, 1], [], []>} : vector<16x32xf32>, vector<32x16xf32>, vector<16x16xf32> -> vector<16x16xf32>
    %c0_56 = arith.constant 0 : index
    %c0_57 = arith.constant 0 : index
    %260 = vector.load %arg6[%c0_56, %c0_57] : memref<1x16xf32, #tpu.memory_space<vmem>>, vector<1x16xf32>
    %261 = vector.broadcast %260 : vector<1x16xf32> to vector<16x16xf32>
    %262 = arith.addf %259, %261 : vector<16x16xf32>
    %cst_58 = arith.constant 0.000000e+00 : f32
    %263 = vector.broadcast %cst_58 : f32 to vector<16x16xf32>
    %264 = arith.maximumf %262, %263 : vector<16x16xf32>
    %c0_59 = arith.constant 0 : index
    %c0_60 = arith.constant 0 : index
    %265 = vector.load %arg7[%c0_59, %c0_60] : memref<16x8xf32, #tpu.memory_space<vmem>>, vector<16x8xf32>
    %cst_61 = arith.constant dense<0.000000e+00> : vector<16x8xf32>
    %266 = tpu.matmul %264, %265, %cst_61 {dimension_numbers = #tpu.dot_dimension_numbers<[1], [0], [0], [1], [0, 0, 1, 1], [], []>} : vector<16x16xf32>, vector<16x8xf32>, vector<16x8xf32> -> vector<16x8xf32>
    %c0_62 = arith.constant 0 : index
    %c0_63 = arith.constant 0 : index
    %267 = vector.load %arg8[%c0_62, %c0_63] : memref<1x8xf32, #tpu.memory_space<vmem>>, vector<1x8xf32>
    %268 = vector.broadcast %267 : vector<1x8xf32> to vector<16x8xf32>
    %269 = arith.addf %266, %268 : vector<16x8xf32>
    %cst_64 = arith.constant 0.000000e+00 : f32
    %270 = vector.broadcast %cst_64 : f32 to vector<16x8xf32>
    %271 = arith.maximumf %269, %270 : vector<16x8xf32>
    %c0_65 = arith.constant 0 : index
    %c0_66 = arith.constant 0 : index
    %272 = vector.load %arg9[%c0_65, %c0_66] : memref<8x1xf32, #tpu.memory_space<vmem>>, vector<8x1xf32>
    %cst_67 = arith.constant dense<0.000000e+00> : vector<16x1xf32>
    %273 = tpu.matmul %271, %272, %cst_67 {dimension_numbers = #tpu.dot_dimension_numbers<[1], [0], [0], [1], [0, 0, 1, 1], [], []>} : vector<16x8xf32>, vector<8x1xf32>, vector<16x1xf32> -> vector<16x1xf32>
    %c0_68 = arith.constant 0 : index
    %c0_69 = arith.constant 0 : index
    %274 = vector.load %arg10[%c0_68, %c0_69] : memref<1x1xf32, #tpu.memory_space<vmem>>, vector<1x1xf32>
    %275 = vector.broadcast %274 : vector<1x1xf32> to vector<16x1xf32>
    %276 = arith.addf %273, %275 : vector<16x1xf32>
    %c0_70 = arith.constant 0 : index
    %c0_71 = arith.constant 0 : index
    %277 = vector.load %arg11[%c0_70, %c0_71] : memref<16x1xf32, #tpu.memory_space<vmem>>, vector<16x1xf32>
    tpu.vector_store %arg11[%c0_70, %c0_71], %276 {strides = array<i32>} : memref<16x1xf32, #tpu.memory_space<vmem>>, vector<16x1xf32>,
    return
  }
}

</mosaic_0001>

<llo_original>
// kernel: tpu_custom_call.1
$region0: #{tpu_custom_call.1}
  #allocation0 [shape = 'u32[]', space=smem, size = 0x4, offset = 0x4, fixed_abs, tag = 'smem constant byte address 0x4 - core index']
  #allocation1 [shape = 'u32[144,128]{1,0:T(1,128)}', space=vmem, size = 0x12000, scoped, tag = 'internal scratch']
  #allocation2 [shape = 'f32[16,32]{1,0:T(8,128)}', space=vmem, size = 0x2000, scoped, tag = 'scratch operand']
  #allocation3 [shape = 'f32[1,1]{1,0:T(1,128)S(1)}', space=vmem, size = 0x200, scoped, tag = 'scoped memory for tpu_custom_call.1']
  %s0 = inlined_call_operand.vmem [shape: f32[16,4], index: 0, kind: input, shape index: {}]
  %s1 = inlined_call_operand.vmem [shape: f32[4,96], index: 1, kind: input, shape index: {}]
  %s2 = inlined_call_operand.vmem [shape: f32[1,96], index: 2, kind: input, shape index: {}]
  %s3 = inlined_call_operand.vmem [shape: f32[32,96], index: 3, kind: input, shape index: {}]
  %s4 = inlined_call_operand.vmem [shape: f32[1,32], index: 4, kind: input, shape index: {}]
  %s5 = inlined_call_operand.vmem [shape: f32[32,16], index: 5, kind: input, shape index: {}]
  %s6 = inlined_call_operand.vmem [shape: f32[1,16], index: 6, kind: input, shape index: {}]
  %s7 = inlined_call_operand.vmem [shape: f32[16,8], index: 7, kind: input, shape index: {}]
  %s8 = inlined_call_operand.vmem [shape: f32[1,8], index: 8, kind: input, shape index: {}]
  %s9 = inlined_call_operand.vmem [shape: f32[8,1], index: 9, kind: input, shape index: {}]
  %s10 = inlined_call_operand.<no memory space> [shape: f32[1,1], index: 10, kind: input, shape index: {}]
  %s11 = inlined_call_operand.vmem [shape: f32[16,1], index: 11, kind: output, shape index: {}]
  %s12 = sld [smem:[#allocation0]]
  $region54: #{tpu_custom_call.1} parent=0
    _
  %s14 = ssub.s32 1, %s12
  %s15 = scalar_select 0, %s14, %s12
  %v16 = vstv %s10
  %17 = vst [vmem:[#allocation3] sm:$0x1] %v16
  // Predicated region
  $region2: #{tpu_custom_call.1} parent=0 // pred_check
    _
  $region3: #{tpu_custom_call.1} parent=0 // pred_check_branch
    %19 = sbr.rel (0) target = $region5
  $region4: #{tpu_custom_call.1} parent=0 // pred_region
    _
  $region5: #{tpu_custom_call.1} parent=0 // pred_fallthru
    _
  // Predicated region
  $region6: #{tpu_custom_call.1} parent=0 // pred_check
    _
  $region7: #{tpu_custom_call.1} parent=0 // pred_check_branch
    %21 = sbr.rel (0) target = $region9
  $region8: #{tpu_custom_call.1} parent=0 // pred_region
    _
  $region9: #{tpu_custom_call.1} parent=0 // pred_fallthru
    _
  // Predicated region
  $region10: #{tpu_custom_call.1} parent=0 // pred_check
    _
  $region11: #{tpu_custom_call.1} parent=0 // pred_check_branch
    %23 = sbr.rel (0) target = $region13
  $region12: #{tpu_custom_call.1} parent=0 // pred_region
    _
  $region13: #{tpu_custom_call.1} parent=0 // pred_fallthru
    _
  // Predicated region
  $region14: #{tpu_custom_call.1} parent=0 // pred_check
    _
  $region15: #{tpu_custom_call.1} parent=0 // pred_check_branch
    %25 = sbr.rel (0) target = $region17
  $region16: #{tpu_custom_call.1} parent=0 // pred_region
    _
  $region17: #{tpu_custom_call.1} parent=0 // pred_fallthru
    _
  // Predicated region
  $region18: #{tpu_custom_call.1} parent=0 // pred_check
    _
  $region19: #{tpu_custom_call.1} parent=0 // pred_check_branch
    %27 = sbr.rel (0) target = $region21
  $region20: #{tpu_custom_call.1} parent=0 // pred_region
    _
  $region21: #{tpu_custom_call.1} parent=0 // pred_fallthru
    _
  // Predicated region
  $region22: #{tpu_custom_call.1} parent=0 // pred_check
    _
  $region23: #{tpu_custom_call.1} parent=0 // pred_check_branch
    %29 = sbr.rel (0) target = $region25
  $region24: #{tpu_custom_call.1} parent=0 // pred_region
    _
  $region25: #{tpu_custom_call.1} parent=0 // pred_fallthru
    _
  // Predicated region
  $region26: #{tpu_custom_call.1} parent=0 // pred_check
    _
  $region27: #{tpu_custom_call.1} parent=0 // pred_check_branch
    %31 = sbr.rel (0) target = $region29
  $region28: #{tpu_custom_call.1} parent=0 // pred_region
    _
  $region29: #{tpu_custom_call.1} parent=0 // pred_fallthru
    _
  // Predicated region
  $region30: #{tpu_custom_call.1} parent=0 // pred_check
    _
  $region31: #{tpu_custom_call.1} parent=0 // pred_check_branch
    %33 = sbr.rel (0) target = $region33
  $region32: #{tpu_custom_call.1} parent=0 // pred_region
    _
  $region33: #{tpu_custom_call.1} parent=0 // pred_fallthru
    _
  // Predicated region
  $region34: #{tpu_custom_call.1} parent=0 // pred_check
    _
  $region35: #{tpu_custom_call.1} parent=0 // pred_check_branch
    %35 = sbr.rel (0) target = $region37
  $region36: #{tpu_custom_call.1} parent=0 // pred_region
    _
  $region37: #{tpu_custom_call.1} parent=0 // pred_fallthru
    _
  // Predicated region
  $region38: #{tpu_custom_call.1} parent=0 // pred_check
    _
  $region39: #{tpu_custom_call.1} parent=0 // pred_check_branch
    %37 = sbr.rel (0) target = $region41
  $region40: #{tpu_custom_call.1} parent=0 // pred_region
    _
  $region41: #{tpu_custom_call.1} parent=0 // pred_fallthru
    _
  // Predicated region
  $region42: #{tpu_custom_call.1} parent=0 // pred_check
    _
  $region43: #{tpu_custom_call.1} parent=0 // pred_check_branch
    %39 = sbr.rel (0) target = $region45
  $region44: #{tpu_custom_call.1} parent=0 // pred_region
    _
  $region45: #{tpu_custom_call.1} parent=0 // pred_fallthru
    _
  %v40 = vld [vmem:[%s0] sm:$0xff]
  %v41 = vld [vmem:[%s0 + $0x8] sm:$0xff]
  %v42 = vld [vmem:[%s1] sm:$0xf]
  %v43 = vld [vmem:[%s2] sm:$0x1]
  %v45 = vlaneseq
  %v46 = vshrl.u32 %v45, 7
  %v47 = vsub.s32 0, %v46
  %v48 = vrot.slane %v43, %v47
  %vm50 = vcmask 31744
  %v52 = vsel %vm50, %v40, 0
  %v55 = vsel %vm50, %v41, 0
  %vm57 = vcmask 1043456
  %v59 = vsel %vm57, %v42, 0
  %61 = vmatprep.subr.mxu0 0.0
  %62 = vmatpush1.msra.mxu0 0.0
  %63 = vmatprep.subr.mxu0 0.0
  %64 = vmatpush1.msra.mxu0 0.0
  %65 = vmatprep.subr.mxu0 0.0
  %66 = vmatpush1.msra.mxu0 0.0
  %67 = vmatprep.subr.mxu0 0.0
  %68 = vmatpush1.msra.mxu0 0.0
  %69 = vmatprep.subr.mxu0 0.0
  %70 = vmatpush1.msra.mxu0 0.0
  %71 = vmatprep.subr.mxu0 0.0
  %72 = vmatpush1.msra.mxu0 0.0
  %73 = vmatprep.subr.mxu0 0.0
  %74 = vmatpush1.msra.mxu0 0.0
  %75 = vmatprep.subr.mxu0 0.0
  %76 = vmatpush1.msra.mxu0 0.0
  %77 = vmatprep.subr.mxu0 0.0
  %78 = vmatpush1.msra.mxu0 0.0
  %79 = vmatprep.subr.mxu0 0.0
  %80 = vmatpush1.msra.mxu0 0.0
  %81 = vmatprep.subr.mxu0 0.0
  %82 = vmatpush1.msra.mxu0 0.0
  %83 = vmatprep.subr.mxu0 0.0
  %84 = vmatpush1.msra.mxu0 0.0
  %85 = vmatprep.subr.mxu0 0.0
  %86 = vmatpush1.msra.mxu0 0.0
  %87 = vmatprep.subr.mxu0 0.0
  %88 = vmatpush1.msra.mxu0 0.0
  %89 = vmatprep.subr.mxu0 0.0
  %90 = vmatpush1.msra.mxu0 0.0
  %91 = vmatprep.subr.mxu0 0.0
  %92 = vmatpush1.msra.mxu0 %v59
  %93 = vmatprep.subr.mxu0 0.0
  %94 = vmatpush2.msra.mxu0 0.0
  %95 = vmatprep.subr.mxu0 0.0
  %96 = vmatpush2.msra.mxu0 0.0
  %97 = vmatprep.subr.mxu0 0.0
  %98 = vmatpush2.msra.mxu0 0.0
  %99 = vmatprep.subr.mxu0 0.0
  %100 = vmatpush2.msra.mxu0 0.0
  %101 = vmatprep.subr.mxu0 0.0
  %102 = vmatpush2.msra.mxu0 0.0
  %103 = vmatprep.subr.mxu0 0.0
  %104 = vmatpush2.msra.mxu0 0.0
  %105 = vmatprep.subr.mxu0 0.0
  %106 = vmatpush2.msra.mxu0 0.0
  %107 = vmatprep.subr.mxu0 0.0
  %108 = vmatpush2.msra.mxu0 0.0
  %109 = vmatprep.subr.mxu0 0.0
  %110 = vmatpush2.msra.mxu0 0.0
  %111 = vmatprep.subr.mxu0 0.0
  %112 = vmatpush2.msra.mxu0 0.0
  %113 = vmatprep.subr.mxu0 0.0
  %114 = vmatpush2.msra.mxu0 0.0
  %115 = vmatprep.subr.mxu0 0.0
  %116 = vmatpush2.msra.mxu0 0.0
  %117 = vmatprep.subr.mxu0 0.0
  %118 = vmatpush2.msra.mxu0 0.0
  %119 = vmatprep.subr.mxu0 0.0
  %120 = vmatpush2.msra.mxu0 0.0
  %121 = vmatprep.subr.mxu0 0.0
  %122 = vmatpush2.msra.mxu0 0.0
  %123 = vmatprep.subr.mxu0 0.0
  %124 = vmatpush2.msra.mxu0 0.0
  %125 = vmatprep.mubr.f32.mxu0 0.0
  %126 = vmatmul.mubr.f32.gmra.mxu0 %v52
  %v127 = vpop.f32.mrf.mxu0
  %v128 = vadd.f32 %v48, %v127
  %v129 = vpop.f32.mrf.mxu0
  %130 = vmatprep.mubr.f32.mxu0 0.0
  %131 = vmatmul.mubr.f32.gmra.mxu0 %v55
  %v132 = vpop.f32.mrf.mxu0
  %v133 = vadd.f32 %v48, %v132
  %v134 = vpop.f32.mrf.mxu0
  %135 = vdwg.mxu0
  %v136 = vld [vmem:[%s3] sm:$0xff]
  %v137 = vld [vmem:[%s3 + $0x8] sm:$0xff]
  %v138 = vld [vmem:[%s3 + $0x10] sm:$0xff]
  %v139 = vld [vmem:[%s3 + $0x18] sm:$0xff]
  %v140 = vld [vmem:[%s4] sm:$0x1]
  %vm141 = vcmask 261120
  %v143 = vsel %vm141, 0.0, 0
  %145 = vmatprep.subr.mxu0 0.0
  %146 = vmatpush1.msra.mxu0 0.0
  %147 = vmatprep.subr.mxu0 0.0
  %148 = vmatpush1.msra.mxu0 0.0
  %149 = vmatprep.subr.mxu0 0.0
  %150 = vmatpush1.msra.mxu0 0.0
  %151 = vmatprep.subr.mxu0 0.0
  %152 = vmatpush1.msra.mxu0 0.0
  %153 = vmatprep.subr.mxu0 0.0
  %154 = vmatpush1.msra.mxu0 0.0
  %155 = vmatprep.subr.mxu0 0.0
  %156 = vmatpush1.msra.mxu0 0.0
  %157 = vmatprep.subr.mxu0 0.0
  %158 = vmatpush1.msra.mxu0 0.0
  %159 = vmatprep.subr.mxu0 0.0
  %160 = vmatpush1.msra.mxu0 0.0
  %161 = vmatprep.subr.mxu0 0.0
  %162 = vmatpush1.msra.mxu0 0.0
  %163 = vmatprep.subr.mxu0 0.0
  %164 = vmatpush1.msra.mxu0 0.0
  %165 = vmatprep.subr.mxu0 0.0
  %166 = vmatpush1.msra.mxu0 0.0
  %167 = vmatprep.subr.mxu0 0.0
  %168 = vmatpush1.msra.mxu0 0.0
  %169 = vmatprep.subr.mxu0 0.0
  %170 = vmatpush1.msra.mxu0 %v139
  %171 = vmatprep.subr.mxu0 0.0
  %172 = vmatpush1.msra.mxu0 %v138
  %173 = vmatprep.subr.mxu0 0.0
  %174 = vmatpush1.msra.mxu0 %v137
  %175 = vmatprep.subr.mxu0 0.0
  %176 = vmatpush1.msra.mxu0 %v136
  %177 = vmatprep.subr.mxu0 0.0
  %178 = vmatpush2.msra.mxu0 0.0
  %179 = vmatprep.subr.mxu0 0.0
  %180 = vmatpush2.msra.mxu0 0.0
  %181 = vmatprep.subr.mxu0 0.0
  %182 = vmatpush2.msra.mxu0 0.0
  %183 = vmatprep.subr.mxu0 0.0
  %184 = vmatpush2.msra.mxu0 0.0
  %185 = vmatprep.subr.mxu0 0.0
  %186 = vmatpush2.msra.mxu0 0.0
  %187 = vmatprep.subr.mxu0 0.0
  %188 = vmatpush2.msra.mxu0 0.0
  %189 = vmatprep.subr.mxu0 0.0
  %190 = vmatpush2.msra.mxu0 0.0
  %191 = vmatprep.subr.mxu0 0.0
  %192 = vmatpush2.msra.mxu0 0.0
  %193 = vmatprep.subr.mxu0 0.0
  %194 = vmatpush2.msra.mxu0 0.0
  %195 = vmatprep.subr.mxu0 0.0
  %196 = vmatpush2.msra.mxu0 0.0
  %197 = vmatprep.subr.mxu0 0.0
  %198 = vmatpush2.msra.mxu0 0.0
  %199 = vmatprep.subr.mxu0 0.0
  %200 = vmatpush2.msra.mxu0 0.0
  %201 = vmatprep.subr.mxu0 0.0
  %202 = vmatpush2.msra.mxu0 0.0
  %203 = vmatprep.subr.mxu0 0.0
  %204 = vmatpush2.msra.mxu0 0.0
  %205 = vmatprep.subr.mxu0 0.0
  %206 = vmatpush2.msra.mxu0 0.0
  %207 = vmatprep.subr.mxu0 0.0
  %208 = vmatpush2.msra.mxu0 0.0
  %209 = vmatprep.mubr.f32.mxu0 0.0
  %210 = vmatmul.mubr.f32.gmra.mxu0 %v143
  %v211 = vpop.f32.mrf.mxu0
  %v212 = vadd.f32 0.0, %v211
  %v213 = vpop.f32.mrf.mxu0
  %214 = vdwg.mxu0
  %v215 = vadd.f32 %v128, %v212
  %v216 = vxor.u32 %v215, 2147483648
  %v217 = vmul.f32 %v216, 1.442695
  %v218 = vpow.pop %v217
  %v219 = vadd.f32 %v218, 1.0
  %v220 = vrcp.pop %v219
  %v221 = vmul.f32 1.0, %v220
  %v223 = vlaneseq
  %v224 = vshrl.u32 %v223, 7
  %v225 = vsub.s32 0, %v224
  %v226 = vrot.slane %v140, %v225
  %227 = vrot.lane.b32.xlu0 %v226, 64
  %v228 = vpop.permute.xlu0 %227
  %v230 = vadd.f32 %v212, %v228
  %232 = vrot.lane.b32.xlu0 %v230, 64
  %v233 = vpop.permute.xlu0 %232
  %v235 = vmul.f32 %v221, %v233
  %237 = vrot.lane.b32.xlu0 %v235, 64
  %v238 = vpop.permute.xlu0 %237
  %v240 = vadd.f32 %v128, %v238
  %v241 = vtanh.pop %v240
  %v242 = vsub.f32 1.0, %v221
  %244 = vrot.lane.b32.xlu0 %v241, 96
  %v245 = vpop.permute.xlu0 %244
  %v247 = vmul.f32 %v242, %v245
  %v248 = vmul.f32 %v221, 0.0
  %v249 = vadd.f32 %v247, %v248
  %251 = vrot.lane.b32.xlu0 %v249, 96
  %v252 = vpop.permute.xlu0 %251
  %vm254 = vcmask 254976
  %255 = vst.msk [vmem:[#allocation2] sm:$0x3] %vm254, %v252
  %v256 = vsel %vm141, %v252, 0
  %258 = vmatprep.subr.mxu0 0.0
  %259 = vmatpush1.msra.mxu0 0.0
  %260 = vmatprep.subr.mxu0 0.0
  %261 = vmatpush1.msra.mxu0 0.0
  %262 = vmatprep.subr.mxu0 0.0
  %263 = vmatpush1.msra.mxu0 0.0
  %264 = vmatprep.subr.mxu0 0.0
  %265 = vmatpush1.msra.mxu0 0.0
  %266 = vmatprep.subr.mxu0 0.0
  %267 = vmatpush1.msra.mxu0 0.0
  %268 = vmatprep.subr.mxu0 0.0
  %269 = vmatpush1.msra.mxu0 0.0
  %270 = vmatprep.subr.mxu0 0.0
  %271 = vmatpush1.msra.mxu0 0.0
  %272 = vmatprep.subr.mxu0 0.0
  %273 = vmatpush1.msra.mxu0 0.0
  %274 = vmatprep.subr.mxu0 0.0
  %275 = vmatpush1.msra.mxu0 0.0
  %276 = vmatprep.subr.mxu0 0.0
  %277 = vmatpush1.msra.mxu0 0.0
  %278 = vmatprep.subr.mxu0 0.0
  %279 = vmatpush1.msra.mxu0 0.0
  %280 = vmatprep.subr.mxu0 0.0
  %281 = vmatpush1.msra.mxu0 0.0
  %282 = vmatprep.subr.mxu0 0.0
  %283 = vmatpush1.msra.mxu0 %v139
  %284 = vmatprep.subr.mxu0 0.0
  %285 = vmatpush1.msra.mxu0 %v138
  %286 = vmatprep.subr.mxu0 0.0
  %287 = vmatpush1.msra.mxu0 %v137
  %288 = vmatprep.subr.mxu0 0.0
  %289 = vmatpush1.msra.mxu0 %v136
  %290 = vmatprep.subr.mxu0 0.0
  %291 = vmatpush2.msra.mxu0 0.0
  %292 = vmatprep.subr.mxu0 0.0
  %293 = vmatpush2.msra.mxu0 0.0
  %294 = vmatprep.subr.mxu0 0.0
  %295 = vmatpush2.msra.mxu0 0.0
  %296 = vmatprep.subr.mxu0 0.0
  %297 = vmatpush2.msra.mxu0 0.0
  %298 = vmatprep.subr.mxu0 0.0
  %299 = vmatpush2.msra.mxu0 0.0
  %300 = vmatprep.subr.mxu0 0.0
  %301 = vmatpush2.msra.mxu0 0.0
  %302 = vmatprep.subr.mxu0 0.0
  %303 = vmatpush2.msra.mxu0 0.0
  %304 = vmatprep.subr.mxu0 0.0
  %305 = vmatpush2.msra.mxu0 0.0
  %306 = vmatprep.subr.mxu0 0.0
  %307 = vmatpush2.msra.mxu0 0.0
  %308 = vmatprep.subr.mxu0 0.0
  %309 = vmatpush2.msra.mxu0 0.0
  %310 = vmatprep.subr.mxu0 0.0
  %311 = vmatpush2.msra.mxu0 0.0
  %312 = vmatprep.subr.mxu0 0.0
  %313 = vmatpush2.msra.mxu0 0.0
  %314 = vmatprep.subr.mxu0 0.0
  %315 = vmatpush2.msra.mxu0 0.0
  %316 = vmatprep.subr.mxu0 0.0
  %317 = vmatpush2.msra.mxu0 0.0
  %318 = vmatprep.subr.mxu0 0.0
  %319 = vmatpush2.msra.mxu0 0.0
  %320 = vmatprep.subr.mxu0 0.0
  %321 = vmatpush2.msra.mxu0 0.0
  %322 = vmatprep.mubr.f32.mxu0 0.0
  %323 = vmatmul.mubr.f32.gmra.mxu0 %v256
  %v324 = vpop.f32.mrf.mxu0
  %v325 = vadd.f32 0.0, %v324
  %v326 = vpop.f32.mrf.mxu0
  %327 = vdwg.mxu0
  %v329 = vrot.slane %v325, 6
  %v331 = vadd.f32 %v128, %v329
  %v332 = vxor.u32 %v331, 2147483648
  %v333 = vmul.f32 %v332, 1.442695
  %v334 = vpow.pop %v333
  %v335 = vadd.f32 %v334, 1.0
  %v336 = vrcp.pop %v335
  %v337 = vmul.f32 1.0, %v336
  %v338 = vadd.f32 %v325, %v228
  %v340 = vrot.slane %v338, 6
  %341 = vrot.lane.b32.xlu0 %v340, 64
  %v342 = vpop.permute.xlu0 %341
  %v344 = vmul.f32 %v337, %v342
  %346 = vrot.lane.b32.xlu0 %v344, 64
  %v347 = vpop.permute.xlu0 %346
  %v349 = vadd.f32 %v128, %v347
  %v350 = vtanh.pop %v349
  %v351 = vsub.f32 1.0, %v337
  %353 = vrot.lane.b32.xlu0 %v350, 96
  %v354 = vpop.permute.xlu0 %353
  %v356 = vmul.f32 %v351, %v354
  %v357 = vrot.slane %v249, 6
  %v359 = vmul.f32 %v337, %v357
  %v360 = vadd.f32 %v356, %v359
  %362 = vrot.lane.b32.xlu0 %v360, 96
  %v363 = vpop.permute.xlu0 %362
  %vm365 = vcmask 257026
  %366 = vst.msk [vmem:[#allocation2] sm:$0xc] %vm365, %v363
  %v367 = vrot.slane %v360, 2
  %368 = vrot.lane.b32.xlu0 %v367, 96
  %v369 = vpop.permute.xlu0 %368
  %v370 = vsel %vm141, %v369, 0
  %372 = vmatprep.subr.mxu0 0.0
  %373 = vmatpush1.msra.mxu0 0.0
  %374 = vmatprep.subr.mxu0 0.0
  %375 = vmatpush1.msra.mxu0 0.0
  %376 = vmatprep.subr.mxu0 0.0
  %377 = vmatpush1.msra.mxu0 0.0
  %378 = vmatprep.subr.mxu0 0.0
  %379 = vmatpush1.msra.mxu0 0.0
  %380 = vmatprep.subr.mxu0 0.0
  %381 = vmatpush1.msra.mxu0 0.0
  %382 = vmatprep.subr.mxu0 0.0
  %383 = vmatpush1.msra.mxu0 0.0
  %384 = vmatprep.subr.mxu0 0.0
  %385 = vmatpush1.msra.mxu0 0.0
  %386 = vmatprep.subr.mxu0 0.0
  %387 = vmatpush1.msra.mxu0 0.0
  %388 = vmatprep.subr.mxu0 0.0
  %389 = vmatpush1.msra.mxu0 0.0
  %390 = vmatprep.subr.mxu0 0.0
  %391 = vmatpush1.msra.mxu0 0.0
  %392 = vmatprep.subr.mxu0 0.0
  %393 = vmatpush1.msra.mxu0 0.0
  %394 = vmatprep.subr.mxu0 0.0
  %395 = vmatpush1.msra.mxu0 0.0
  %396 = vmatprep.subr.mxu0 0.0
  %397 = vmatpush1.msra.mxu0 %v139
  %398 = vmatprep.subr.mxu0 0.0
  %399 = vmatpush1.msra.mxu0 %v138
  %400 = vmatprep.subr.mxu0 0.0
  %401 = vmatpush1.msra.mxu0 %v137
  %402 = vmatprep.subr.mxu0 0.0
  %403 = vmatpush1.msra.mxu0 %v136
  %404 = vmatprep.subr.mxu0 0.0
  %405 = vmatpush2.msra.mxu0 0.0
  %406 = vmatprep.subr.mxu0 0.0
  %407 = vmatpush2.msra.mxu0 0.0
  %408 = vmatprep.subr.mxu0 0.0
  %409 = vmatpush2.msra.mxu0 0.0
  %410 = vmatprep.subr.mxu0 0.0
  %411 = vmatpush2.msra.mxu0 0.0
  %412 = vmatprep.subr.mxu0 0.0
  %413 = vmatpush2.msra.mxu0 0.0
  %414 = vmatprep.subr.mxu0 0.0
  %415 = vmatpush2.msra.mxu0 0.0
  %416 = vmatprep.subr.mxu0 0.0
  %417 = vmatpush2.msra.mxu0 0.0
  %418 = vmatprep.subr.mxu0 0.0
  %419 = vmatpush2.msra.mxu0 0.0
  %420 = vmatprep.subr.mxu0 0.0
  %421 = vmatpush2.msra.mxu0 0.0
  %422 = vmatprep.subr.mxu0 0.0
  %423 = vmatpush2.msra.mxu0 0.0
  %424 = vmatprep.subr.mxu0 0.0
  %425 = vmatpush2.msra.mxu0 0.0
  %426 = vmatprep.subr.mxu0 0.0
  %427 = vmatpush2.msra.mxu0 0.0
  %428 = vmatprep.subr.mxu0 0.0
  %429 = vmatpush2.msra.mxu0 0.0
  %430 = vmatprep.subr.mxu0 0.0
  %431 = vmatpush2.msra.mxu0 0.0
  %432 = vmatprep.subr.mxu0 0.0
  %433 = vmatpush2.msra.mxu0 0.0
  %434 = vmatprep.subr.mxu0 0.0
  %435 = vmatpush2.msra.mxu0 0.0
  %436 = vmatprep.mubr.f32.mxu0 0.0
  %437 = vmatmul.mubr.f32.gmra.mxu0 %v370
  %v438 = vpop.f32.mrf.mxu0
  %v439 = vadd.f32 0.0, %v438
  %v440 = vpop.f32.mrf.mxu0
  %441 = vdwg.mxu0
  %v443 = vrot.slane %v439, 4
  %v445 = vadd.f32 %v128, %v443
  %v446 = vxor.u32 %v445, 2147483648
  %v447 = vmul.f32 %v446, 1.442695
  %v448 = vpow.pop %v447
  %v449 = vadd.f32 %v448, 1.0
  %v450 = vrcp.pop %v449
  %v451 = vmul.f32 1.0, %v450
  %v452 = vadd.f32 %v439, %v228
  %v454 = vrot.slane %v452, 4
  %455 = vrot.lane.b32.xlu0 %v454, 64
  %v456 = vpop.permute.xlu0 %455
  %v458 = vmul.f32 %v451, %v456
  %460 = vrot.lane.b32.xlu0 %v458, 64
  %v461 = vpop.permute.xlu0 %460
  %v463 = vadd.f32 %v128, %v461
  %v464 = vtanh.pop %v463
  %v465 = vsub.f32 1.0, %v451
  %467 = vrot.lane.b32.xlu0 %v464, 96
  %v468 = vpop.permute.xlu0 %467
  %v470 = vmul.f32 %v465, %v468
  %v471 = vrot.slane %v360, 6
  %v473 = vmul.f32 %v451, %v471
  %v474 = vadd.f32 %v470, %v473
  %476 = vrot.lane.b32.xlu0 %v474, 96
  %v477 = vpop.permute.xlu0 %476
  %vm479 = vcmask 259076
  %480 = vst.msk [vmem:[#allocation2] sm:$0x30] %vm479, %v477
  %v481 = vrot.slane %v474, 4
  %482 = vrot.lane.b32.xlu0 %v481, 96
  %v483 = vpop.permute.xlu0 %482
  %v484 = vsel %vm141, %v483, 0
  %486 = vmatprep.subr.mxu0 0.0
  %487 = vmatpush1.msra.mxu0 0.0
  %488 = vmatprep.subr.mxu0 0.0
  %489 = vmatpush1.msra.mxu0 0.0
  %490 = vmatprep.subr.mxu0 0.0
  %491 = vmatpush1.msra.mxu0 0.0
  %492 = vmatprep.subr.mxu0 0.0
  %493 = vmatpush1.msra.mxu0 0.0
  %494 = vmatprep.subr.mxu0 0.0
  %495 = vmatpush1.msra.mxu0 0.0
  %496 = vmatprep.subr.mxu0 0.0
  %497 = vmatpush1.msra.mxu0 0.0
  %498 = vmatprep.subr.mxu0 0.0
  %499 = vmatpush1.msra.mxu0 0.0
  %500 = vmatprep.subr.mxu0 0.0
  %501 = vmatpush1.msra.mxu0 0.0
  %502 = vmatprep.subr.mxu0 0.0
  %503 = vmatpush1.msra.mxu0 0.0
  %504 = vmatprep.subr.mxu0 0.0
  %505 = vmatpush1.msra.mxu0 0.0
  %506 = vmatprep.subr.mxu0 0.0
  %507 = vmatpush1.msra.mxu0 0.0
  %508 = vmatprep.subr.mxu0 0.0
  %509 = vmatpush1.msra.mxu0 0.0
  %510 = vmatprep.subr.mxu0 0.0
  %511 = vmatpush1.msra.mxu0 %v139
  %512 = vmatprep.subr.mxu0 0.0
  %513 = vmatpush1.msra.mxu0 %v138
  %514 = vmatprep.subr.mxu0 0.0
  %515 = vmatpush1.msra.mxu0 %v137
  %516 = vmatprep.subr.mxu0 0.0
  %517 = vmatpush1.msra.mxu0 %v136
  %518 = vmatprep.subr.mxu0 0.0
  %519 = vmatpush2.msra.mxu0 0.0
  %520 = vmatprep.subr.mxu0 0.0
  %521 = vmatpush2.msra.mxu0 0.0
  %522 = vmatprep.subr.mxu0 0.0
  %523 = vmatpush2.msra.mxu0 0.0
  %524 = vmatprep.subr.mxu0 0.0
  %525 = vmatpush2.msra.mxu0 0.0
  %526 = vmatprep.subr.mxu0 0.0
  %527 = vmatpush2.msra.mxu0 0.0
  %528 = vmatprep.subr.mxu0 0.0
  %529 = vmatpush2.msra.mxu0 0.0
  %530 = vmatprep.subr.mxu0 0.0
  %531 = vmatpush2.msra.mxu0 0.0
  %532 = vmatprep.subr.mxu0 0.0
  %533 = vmatpush2.msra.mxu0 0.0
  %534 = vmatprep.subr.mxu0 0.0
  %535 = vmatpush2.msra.mxu0 0.0
  %536 = vmatprep.subr.mxu0 0.0
  %537 = vmatpush2.msra.mxu0 0.0
  %538 = vmatprep.subr.mxu0 0.0
  %539 = vmatpush2.msra.mxu0 0.0
  %540 = vmatprep.subr.mxu0 0.0
  %541 = vmatpush2.msra.mxu0 0.0
  %542 = vmatprep.subr.mxu0 0.0
  %543 = vmatpush2.msra.mxu0 0.0
  %544 = vmatprep.subr.mxu0 0.0
  %545 = vmatpush2.msra.mxu0 0.0
  %546 = vmatprep.subr.mxu0 0.0
  %547 = vmatpush2.msra.mxu0 0.0
  %548 = vmatprep.subr.mxu0 0.0
  %549 = vmatpush2.msra.mxu0 0.0
  %550 = vmatprep.mubr.f32.mxu0 0.0
  %551 = vmatmul.mubr.f32.gmra.mxu0 %v484
  %v552 = vpop.f32.mrf.mxu0
  %v553 = vadd.f32 0.0, %v552
  %v554 = vpop.f32.mrf.mxu0
  %555 = vdwg.mxu0
  %v557 = vrot.slane %v553, 2
  %v559 = vadd.f32 %v128, %v557
  %v560 = vxor.u32 %v559, 2147483648
  %v561 = vmul.f32 %v560, 1.442695
  %v562 = vpow.pop %v561
  %v563 = vadd.f32 %v562, 1.0
  %v564 = vrcp.pop %v563
  %v565 = vmul.f32 1.0, %v564
  %v566 = vadd.f32 %v553, %v228
  %v568 = vrot.slane %v566, 2
  %569 = vrot.lane.b32.xlu0 %v568, 64
  %v570 = vpop.permute.xlu0 %569
  %v572 = vmul.f32 %v565, %v570
  %574 = vrot.lane.b32.xlu0 %v572, 64
  %v575 = vpop.permute.xlu0 %574
  %v577 = vadd.f32 %v128, %v575
  %v578 = vtanh.pop %v577
  %v579 = vsub.f32 1.0, %v565
  %581 = vrot.lane.b32.xlu0 %v578, 96
  %v582 = vpop.permute.xlu0 %581
  %v584 = vmul.f32 %v579, %v582
  %v585 = vrot.slane %v474, 6
  %v587 = vmul.f32 %v565, %v585
  %v588 = vadd.f32 %v584, %v587
  %590 = vrot.lane.b32.xlu0 %v588, 96
  %v591 = vpop.permute.xlu0 %590
  %vm593 = vcmask 261126
  %594 = vst.msk [vmem:[#allocation2] sm:$0xc0] %vm593, %v591
  %v595 = vrot.slane %v588, 6
  %596 = vrot.lane.b32.xlu0 %v595, 96
  %v597 = vpop.permute.xlu0 %596
  %v598 = vsel %vm141, %v597, 0
  %600 = vmatprep.subr.mxu0 0.0
  %601 = vmatpush1.msra.mxu0 0.0
  %602 = vmatprep.subr.mxu0 0.0
  %603 = vmatpush1.msra.mxu0 0.0
  %604 = vmatprep.subr.mxu0 0.0
  %605 = vmatpush1.msra.mxu0 0.0
  %606 = vmatprep.subr.mxu0 0.0
  %607 = vmatpush1.msra.mxu0 0.0
  %608 = vmatprep.subr.mxu0 0.0
  %609 = vmatpush1.msra.mxu0 0.0
  %610 = vmatprep.subr.mxu0 0.0
  %611 = vmatpush1.msra.mxu0 0.0
  %612 = vmatprep.subr.mxu0 0.0
  %613 = vmatpush1.msra.mxu0 0.0
  %614 = vmatprep.subr.mxu0 0.0
  %615 = vmatpush1.msra.mxu0 0.0
  %616 = vmatprep.subr.mxu0 0.0
  %617 = vmatpush1.msra.mxu0 0.0
  %618 = vmatprep.subr.mxu0 0.0
  %619 = vmatpush1.msra.mxu0 0.0
  %620 = vmatprep.subr.mxu0 0.0
  %621 = vmatpush1.msra.mxu0 0.0
  %622 = vmatprep.subr.mxu0 0.0
  %623 = vmatpush1.msra.mxu0 0.0
  %624 = vmatprep.subr.mxu0 0.0
  %625 = vmatpush1.msra.mxu0 %v139
  %626 = vmatprep.subr.mxu0 0.0
  %627 = vmatpush1.msra.mxu0 %v138
  %628 = vmatprep.subr.mxu0 0.0
  %629 = vmatpush1.msra.mxu0 %v137
  %630 = vmatprep.subr.mxu0 0.0
  %631 = vmatpush1.msra.mxu0 %v136
  %632 = vmatprep.subr.mxu0 0.0
  %633 = vmatpush2.msra.mxu0 0.0
  %634 = vmatprep.subr.mxu0 0.0
  %635 = vmatpush2.msra.mxu0 0.0
  %636 = vmatprep.subr.mxu0 0.0
  %637 = vmatpush2.msra.mxu0 0.0
  %638 = vmatprep.subr.mxu0 0.0
  %639 = vmatpush2.msra.mxu0 0.0
  %640 = vmatprep.subr.mxu0 0.0
  %641 = vmatpush2.msra.mxu0 0.0
  %642 = vmatprep.subr.mxu0 0.0
  %643 = vmatpush2.msra.mxu0 0.0
  %644 = vmatprep.subr.mxu0 0.0
  %645 = vmatpush2.msra.mxu0 0.0
  %646 = vmatprep.subr.mxu0 0.0
  %647 = vmatpush2.msra.mxu0 0.0
  %648 = vmatprep.subr.mxu0 0.0
  %649 = vmatpush2.msra.mxu0 0.0
  %650 = vmatprep.subr.mxu0 0.0
  %651 = vmatpush2.msra.mxu0 0.0
  %652 = vmatprep.subr.mxu0 0.0
  %653 = vmatpush2.msra.mxu0 0.0
  %654 = vmatprep.subr.mxu0 0.0
  %655 = vmatpush2.msra.mxu0 0.0
  %656 = vmatprep.subr.mxu0 0.0
  %657 = vmatpush2.msra.mxu0 0.0
  %658 = vmatprep.subr.mxu0 0.0
  %659 = vmatpush2.msra.mxu0 0.0
  %660 = vmatprep.subr.mxu0 0.0
  %661 = vmatpush2.msra.mxu0 0.0
  %662 = vmatprep.subr.mxu0 0.0
  %663 = vmatpush2.msra.mxu0 0.0
  %664 = vmatprep.mubr.f32.mxu0 0.0
  %665 = vmatmul.mubr.f32.gmra.mxu0 %v598
  %v666 = vpop.f32.mrf.mxu0
  %v667 = vadd.f32 0.0, %v666
  %v668 = vpop.f32.mrf.mxu0
  %669 = vdwg.mxu0
  %v670 = vadd.f32 %v133, %v667
  %v671 = vxor.u32 %v670, 2147483648
  %v672 = vmul.f32 %v671, 1.442695
  %v673 = vpow.pop %v672
  %v674 = vadd.f32 %v673, 1.0
  %v675 = vrcp.pop %v674
  %v676 = vmul.f32 1.0, %v675
  %v677 = vadd.f32 %v667, %v228
  %679 = vrot.lane.b32.xlu0 %v677, 64
  %v680 = vpop.permute.xlu0 %679
  %v682 = vmul.f32 %v676, %v680
  %684 = vrot.lane.b32.xlu0 %v682, 64
  %v685 = vpop.permute.xlu0 %684
  %v687 = vadd.f32 %v133, %v685
  %v688 = vtanh.pop %v687
  %v689 = vsub.f32 1.0, %v676
  %691 = vrot.lane.b32.xlu0 %v688, 96
  %v692 = vpop.permute.xlu0 %691
  %v694 = vmul.f32 %v689, %v692
  %v696 = vmul.f32 %v676, %v595
  %v697 = vadd.f32 %v694, %v696
  %699 = vrot.lane.b32.xlu0 %v697, 96
  %v700 = vpop.permute.xlu0 %699
  %702 = vst.msk [vmem:[#allocation2 + $0x8] sm:$0x3] %vm254, %v700
  %v703 = vsel %vm141, %v700, 0
  %705 = vmatprep.subr.mxu0 0.0
  %706 = vmatpush1.msra.mxu0 0.0
  %707 = vmatprep.subr.mxu0 0.0
  %708 = vmatpush1.msra.mxu0 0.0
  %709 = vmatprep.subr.mxu0 0.0
  %710 = vmatpush1.msra.mxu0 0.0
  %711 = vmatprep.subr.mxu0 0.0
  %712 = vmatpush1.msra.mxu0 0.0
  %713 = vmatprep.subr.mxu0 0.0
  %714 = vmatpush1.msra.mxu0 0.0
  %715 = vmatprep.subr.mxu0 0.0
  %716 = vmatpush1.msra.mxu0 0.0
  %717 = vmatprep.subr.mxu0 0.0
  %718 = vmatpush1.msra.mxu0 0.0
  %719 = vmatprep.subr.mxu0 0.0
  %720 = vmatpush1.msra.mxu0 0.0
  %721 = vmatprep.subr.mxu0 0.0
  %722 = vmatpush1.msra.mxu0 0.0
  %723 = vmatprep.subr.mxu0 0.0
  %724 = vmatpush1.msra.mxu0 0.0
  %725 = vmatprep.subr.mxu0 0.0
  %726 = vmatpush1.msra.mxu0 0.0
  %727 = vmatprep.subr.mxu0 0.0
  %728 = vmatpush1.msra.mxu0 0.0
  %729 = vmatprep.subr.mxu0 0.0
  %730 = vmatpush1.msra.mxu0 %v139
  %731 = vmatprep.subr.mxu0 0.0
  %732 = vmatpush1.msra.mxu0 %v138
  %733 = vmatprep.subr.mxu0 0.0
  %734 = vmatpush1.msra.mxu0 %v137
  %735 = vmatprep.subr.mxu0 0.0
  %736 = vmatpush1.msra.mxu0 %v136
  %737 = vmatprep.subr.mxu0 0.0
  %738 = vmatpush2.msra.mxu0 0.0
  %739 = vmatprep.subr.mxu0 0.0
  %740 = vmatpush2.msra.mxu0 0.0
  %741 = vmatprep.subr.mxu0 0.0
  %742 = vmatpush2.msra.mxu0 0.0
  %743 = vmatprep.subr.mxu0 0.0
  %744 = vmatpush2.msra.mxu0 0.0
  %745 = vmatprep.subr.mxu0 0.0
  %746 = vmatpush2.msra.mxu0 0.0
  %747 = vmatprep.subr.mxu0 0.0
  %748 = vmatpush2.msra.mxu0 0.0
  %749 = vmatprep.subr.mxu0 0.0
  %750 = vmatpush2.msra.mxu0 0.0
  %751 = vmatprep.subr.mxu0 0.0
  %752 = vmatpush2.msra.mxu0 0.0
  %753 = vmatprep.subr.mxu0 0.0
  %754 = vmatpush2.msra.mxu0 0.0
  %755 = vmatprep.subr.mxu0 0.0
  %756 = vmatpush2.msra.mxu0 0.0
  %757 = vmatprep.subr.mxu0 0.0
  %758 = vmatpush2.msra.mxu0 0.0
  %759 = vmatprep.subr.mxu0 0.0
  %760 = vmatpush2.msra.mxu0 0.0
  %761 = vmatprep.subr.mxu0 0.0
  %762 = vmatpush2.msra.mxu0 0.0
  %763 = vmatprep.subr.mxu0 0.0
  %764 = vmatpush2.msra.mxu0 0.0
  %765 = vmatprep.subr.mxu0 0.0
  %766 = vmatpush2.msra.mxu0 0.0
  %767 = vmatprep.subr.mxu0 0.0
  %768 = vmatpush2.msra.mxu0 0.0
  %769 = vmatprep.mubr.f32.mxu0 0.0
  %770 = vmatmul.mubr.f32.gmra.mxu0 %v703
  %v771 = vpop.f32.mrf.mxu0
  %v772 = vadd.f32 0.0, %v771
  %v773 = vpop.f32.mrf.mxu0
  %774 = vdwg.mxu0
  %v776 = vrot.slane %v772, 6
  %v778 = vadd.f32 %v133, %v776
  %v779 = vxor.u32 %v778, 2147483648
  %v780 = vmul.f32 %v779, 1.442695
  %v781 = vpow.pop %v780
  %v782 = vadd.f32 %v781, 1.0
  %v783 = vrcp.pop %v782
  %v784 = vmul.f32 1.0, %v783
  %v785 = vadd.f32 %v772, %v228
  %v787 = vrot.slane %v785, 6
  %788 = vrot.lane.b32.xlu0 %v787, 64
  %v789 = vpop.permute.xlu0 %788
  %v791 = vmul.f32 %v784, %v789
  %793 = vrot.lane.b32.xlu0 %v791, 64
  %v794 = vpop.permute.xlu0 %793
  %v796 = vadd.f32 %v133, %v794
  %v797 = vtanh.pop %v796
  %v798 = vsub.f32 1.0, %v784
  %800 = vrot.lane.b32.xlu0 %v797, 96
  %v801 = vpop.permute.xlu0 %800
  %v803 = vmul.f32 %v798, %v801
  %v804 = vrot.slane %v697, 6
  %v806 = vmul.f32 %v784, %v804
  %v807 = vadd.f32 %v803, %v806
  %809 = vrot.lane.b32.xlu0 %v807, 96
  %v810 = vpop.permute.xlu0 %809
  %812 = vst.msk [vmem:[#allocation2 + $0x8] sm:$0xc] %vm365, %v810
  %v813 = vrot.slane %v807, 2
  %814 = vrot.lane.b32.xlu0 %v813, 96
  %v815 = vpop.permute.xlu0 %814
  %v816 = vsel %vm141, %v815, 0
  %818 = vmatprep.subr.mxu0 0.0
  %819 = vmatpush1.msra.mxu0 0.0
  %820 = vmatprep.subr.mxu0 0.0
  %821 = vmatpush1.msra.mxu0 0.0
  %822 = vmatprep.subr.mxu0 0.0
  %823 = vmatpush1.msra.mxu0 0.0
  %824 = vmatprep.subr.mxu0 0.0
  %825 = vmatpush1.msra.mxu0 0.0
  %826 = vmatprep.subr.mxu0 0.0
  %827 = vmatpush1.msra.mxu0 0.0
  %828 = vmatprep.subr.mxu0 0.0
  %829 = vmatpush1.msra.mxu0 0.0
  %830 = vmatprep.subr.mxu0 0.0
  %831 = vmatpush1.msra.mxu0 0.0
  %832 = vmatprep.subr.mxu0 0.0
  %833 = vmatpush1.msra.mxu0 0.0
  %834 = vmatprep.subr.mxu0 0.0
  %835 = vmatpush1.msra.mxu0 0.0
  %836 = vmatprep.subr.mxu0 0.0
  %837 = vmatpush1.msra.mxu0 0.0
  %838 = vmatprep.subr.mxu0 0.0
  %839 = vmatpush1.msra.mxu0 0.0
  %840 = vmatprep.subr.mxu0 0.0
  %841 = vmatpush1.msra.mxu0 0.0
  %842 = vmatprep.subr.mxu0 0.0
  %843 = vmatpush1.msra.mxu0 %v139
  %844 = vmatprep.subr.mxu0 0.0
  %845 = vmatpush1.msra.mxu0 %v138
  %846 = vmatprep.subr.mxu0 0.0
  %847 = vmatpush1.msra.mxu0 %v137
  %848 = vmatprep.subr.mxu0 0.0
  %849 = vmatpush1.msra.mxu0 %v136
  %850 = vmatprep.subr.mxu0 0.0
  %851 = vmatpush2.msra.mxu0 0.0
  %852 = vmatprep.subr.mxu0 0.0
  %853 = vmatpush2.msra.mxu0 0.0
  %854 = vmatprep.subr.mxu0 0.0
  %855 = vmatpush2.msra.mxu0 0.0
  %856 = vmatprep.subr.mxu0 0.0
  %857 = vmatpush2.msra.mxu0 0.0
  %858 = vmatprep.subr.mxu0 0.0
  %859 = vmatpush2.msra.mxu0 0.0
  %860 = vmatprep.subr.mxu0 0.0
  %861 = vmatpush2.msra.mxu0 0.0
  %862 = vmatprep.subr.mxu0 0.0
  %863 = vmatpush2.msra.mxu0 0.0
  %864 = vmatprep.subr.mxu0 0.0
  %865 = vmatpush2.msra.mxu0 0.0
  %866 = vmatprep.subr.mxu0 0.0
  %867 = vmatpush2.msra.mxu0 0.0
  %868 = vmatprep.subr.mxu0 0.0
  %869 = vmatpush2.msra.mxu0 0.0
  %870 = vmatprep.subr.mxu0 0.0
  %871 = vmatpush2.msra.mxu0 0.0
  %872 = vmatprep.subr.mxu0 0.0
  %873 = vmatpush2.msra.mxu0 0.0
  %874 = vmatprep.subr.mxu0 0.0
  %875 = vmatpush2.msra.mxu0 0.0
  %876 = vmatprep.subr.mxu0 0.0
  %877 = vmatpush2.msra.mxu0 0.0
  %878 = vmatprep.subr.mxu0 0.0
  %879 = vmatpush2.msra.mxu0 0.0
  %880 = vmatprep.subr.mxu0 0.0
  %881 = vmatpush2.msra.mxu0 0.0
  %882 = vmatprep.mubr.f32.mxu0 0.0
  %883 = vmatmul.mubr.f32.gmra.mxu0 %v816
  %v884 = vpop.f32.mrf.mxu0
  %v885 = vadd.f32 0.0, %v884
  %v886 = vpop.f32.mrf.mxu0
  %887 = vdwg.mxu0
  %v889 = vrot.slane %v885, 4
  %v891 = vadd.f32 %v133, %v889
  %v892 = vxor.u32 %v891, 2147483648
  %v893 = vmul.f32 %v892, 1.442695
  %v894 = vpow.pop %v893
  %v895 = vadd.f32 %v894, 1.0
  %v896 = vrcp.pop %v895
  %v897 = vmul.f32 1.0, %v896
  %v898 = vadd.f32 %v885, %v228
  %v900 = vrot.slane %v898, 4
  %901 = vrot.lane.b32.xlu0 %v900, 64
  %v902 = vpop.permute.xlu0 %901
  %v904 = vmul.f32 %v897, %v902
  %906 = vrot.lane.b32.xlu0 %v904, 64
  %v907 = vpop.permute.xlu0 %906
  %v909 = vadd.f32 %v133, %v907
  %v910 = vtanh.pop %v909
  %v911 = vsub.f32 1.0, %v897
  %913 = vrot.lane.b32.xlu0 %v910, 96
  %v914 = vpop.permute.xlu0 %913
  %v916 = vmul.f32 %v911, %v914
  %v917 = vrot.slane %v807, 6
  %v919 = vmul.f32 %v897, %v917
  %v920 = vadd.f32 %v916, %v919
  %922 = vrot.lane.b32.xlu0 %v920, 96
  %v923 = vpop.permute.xlu0 %922
  %925 = vst.msk [vmem:[#allocation2 + $0x8] sm:$0x30] %vm479, %v923
  %v926 = vrot.slane %v920, 4
  %927 = vrot.lane.b32.xlu0 %v926, 96
  %v928 = vpop.permute.xlu0 %927
  %v929 = vsel %vm141, %v928, 0
  %931 = vmatprep.subr.mxu0 0.0
  %932 = vmatpush1.msra.mxu0 0.0
  %933 = vmatprep.subr.mxu0 0.0
  %934 = vmatpush1.msra.mxu0 0.0
  %935 = vmatprep.subr.mxu0 0.0
  %936 = vmatpush1.msra.mxu0 0.0
  %937 = vmatprep.subr.mxu0 0.0
  %938 = vmatpush1.msra.mxu0 0.0
  %939 = vmatprep.subr.mxu0 0.0
  %940 = vmatpush1.msra.mxu0 0.0
  %941 = vmatprep.subr.mxu0 0.0
  %942 = vmatpush1.msra.mxu0 0.0
  %943 = vmatprep.subr.mxu0 0.0
  %944 = vmatpush1.msra.mxu0 0.0
  %945 = vmatprep.subr.mxu0 0.0
  %946 = vmatpush1.msra.mxu0 0.0
  %947 = vmatprep.subr.mxu0 0.0
  %948 = vmatpush1.msra.mxu0 0.0
  %949 = vmatprep.subr.mxu0 0.0
  %950 = vmatpush1.msra.mxu0 0.0
  %951 = vmatprep.subr.mxu0 0.0
  %952 = vmatpush1.msra.mxu0 0.0
  %953 = vmatprep.subr.mxu0 0.0
  %954 = vmatpush1.msra.mxu0 0.0
  %955 = vmatprep.subr.mxu0 0.0
  %956 = vmatpush1.msra.mxu0 %v139
  %957 = vmatprep.subr.mxu0 0.0
  %958 = vmatpush1.msra.mxu0 %v138
  %959 = vmatprep.subr.mxu0 0.0
  %960 = vmatpush1.msra.mxu0 %v137
  %961 = vmatprep.subr.mxu0 0.0
  %962 = vmatpush1.msra.mxu0 %v136
  %963 = vmatprep.subr.mxu0 0.0
  %964 = vmatpush2.msra.mxu0 0.0
  %965 = vmatprep.subr.mxu0 0.0
  %966 = vmatpush2.msra.mxu0 0.0
  %967 = vmatprep.subr.mxu0 0.0
  %968 = vmatpush2.msra.mxu0 0.0
  %969 = vmatprep.subr.mxu0 0.0
  %970 = vmatpush2.msra.mxu0 0.0
  %971 = vmatprep.subr.mxu0 0.0
  %972 = vmatpush2.msra.mxu0 0.0
  %973 = vmatprep.subr.mxu0 0.0
  %974 = vmatpush2.msra.mxu0 0.0
  %975 = vmatprep.subr.mxu0 0.0
  %976 = vmatpush2.msra.mxu0 0.0
  %977 = vmatprep.subr.mxu0 0.0
  %978 = vmatpush2.msra.mxu0 0.0
  %979 = vmatprep.subr.mxu0 0.0
  %980 = vmatpush2.msra.mxu0 0.0
  %981 = vmatprep.subr.mxu0 0.0
  %982 = vmatpush2.msra.mxu0 0.0
  %983 = vmatprep.subr.mxu0 0.0
  %984 = vmatpush2.msra.mxu0 0.0
  %985 = vmatprep.subr.mxu0 0.0
  %986 = vmatpush2.msra.mxu0 0.0
  %987 = vmatprep.subr.mxu0 0.0
  %988 = vmatpush2.msra.mxu0 0.0
  %989 = vmatprep.subr.mxu0 0.0
  %990 = vmatpush2.msra.mxu0 0.0
  %991 = vmatprep.subr.mxu0 0.0
  %992 = vmatpush2.msra.mxu0 0.0
  %993 = vmatprep.subr.mxu0 0.0
  %994 = vmatpush2.msra.mxu0 0.0
  %995 = vmatprep.mubr.f32.mxu0 0.0
  %996 = vmatmul.mubr.f32.gmra.mxu0 %v929
  %v997 = vpop.f32.mrf.mxu0
  %v998 = vadd.f32 0.0, %v997
  %v999 = vpop.f32.mrf.mxu0
  %1000 = vdwg.mxu0
  %v1002 = vrot.slane %v998, 2
  %v1004 = vadd.f32 %v133, %v1002
  %v1005 = vxor.u32 %v1004, 2147483648
  %v1006 = vmul.f32 %v1005, 1.442695
  %v1007 = vpow.pop %v1006
  %v1008 = vadd.f32 %v1007, 1.0
  %v1009 = vrcp.pop %v1008
  %v1010 = vmul.f32 1.0, %v1009
  %v1011 = vadd.f32 %v998, %v228
  %v1013 = vrot.slane %v1011, 2
  %1014 = vrot.lane.b32.xlu0 %v1013, 64
  %v1015 = vpop.permute.xlu0 %1014
  %v1017 = vmul.f32 %v1010, %v1015
  %1019 = vrot.lane.b32.xlu0 %v1017, 64
  %v1020 = vpop.permute.xlu0 %1019
  %v1022 = vadd.f32 %v133, %v1020
  %v1023 = vtanh.pop %v1022
  %v1024 = vsub.f32 1.0, %v1010
  %1026 = vrot.lane.b32.xlu0 %v1023, 96
  %v1027 = vpop.permute.xlu0 %1026
  %v1029 = vmul.f32 %v1024, %v1027
  %v1030 = vrot.slane %v920, 6
  %v1032 = vmul.f32 %v1010, %v1030
  %v1033 = vadd.f32 %v1029, %v1032
  %1035 = vrot.lane.b32.xlu0 %v1033, 96
  %v1036 = vpop.permute.xlu0 %1035
  %1038 = vst.msk [vmem:[#allocation2 + $0x8] sm:$0xc0] %vm593, %v1036
  %v1039 = vld [vmem:[#allocation2] sm:$0xff]
  %v1040 = vld [vmem:[#allocation2 + $0x8] sm:$0xff]
  %v1041 = vld [vmem:[%s5] sm:$0xff]
  %v1042 = vld [vmem:[%s5 + $0x8] sm:$0xff]
  %v1043 = vld [vmem:[%s5 + $0x10] sm:$0xff]
  %v1044 = vld [vmem:[%s5 + $0x18] sm:$0xff]
  %v1045 = vld [vmem:[%s6] sm:$0x1]
  %v1047 = vlaneseq
  %v1048 = vshrl.u32 %v1047, 7
  %v1049 = vsub.s32 0, %v1048
  %v1050 = vrot.slane %v1045, %v1049
  %v1053 = vsel %vm141, %v1039, 0
  %v1056 = vsel %vm141, %v1040, 0
  %1058 = vmatprep.subr.mxu0 0.0
  %1059 = vmatpush1.msra.mxu0 0.0
  %1060 = vmatprep.subr.mxu0 0.0
  %1061 = vmatpush1.msra.mxu0 0.0
  %1062 = vmatprep.subr.mxu0 0.0
  %1063 = vmatpush1.msra.mxu0 0.0
  %1064 = vmatprep.subr.mxu0 0.0
  %1065 = vmatpush1.msra.mxu0 0.0
  %1066 = vmatprep.subr.mxu0 0.0
  %1067 = vmatpush1.msra.mxu0 0.0
  %1068 = vmatprep.subr.mxu0 0.0
  %1069 = vmatpush1.msra.mxu0 0.0
  %1070 = vmatprep.subr.mxu0 0.0
  %1071 = vmatpush1.msra.mxu0 0.0
  %1072 = vmatprep.subr.mxu0 0.0
  %1073 = vmatpush1.msra.mxu0 0.0
  %1074 = vmatprep.subr.mxu0 0.0
  %1075 = vmatpush1.msra.mxu0 0.0
  %1076 = vmatprep.subr.mxu0 0.0
  %1077 = vmatpush1.msra.mxu0 0.0
  %1078 = vmatprep.subr.mxu0 0.0
  %1079 = vmatpush1.msra.mxu0 0.0
  %1080 = vmatprep.subr.mxu0 0.0
  %1081 = vmatpush1.msra.mxu0 0.0
  %1082 = vmatprep.subr.mxu0 0.0
  %1083 = vmatpush1.msra.mxu0 %v1044
  %1084 = vmatprep.subr.mxu0 0.0
  %1085 = vmatpush1.msra.mxu0 %v1043
  %1086 = vmatprep.subr.mxu0 0.0
  %1087 = vmatpush1.msra.mxu0 %v1042
  %1088 = vmatprep.subr.mxu0 0.0
  %1089 = vmatpush1.msra.mxu0 %v1041
  %1090 = vmatprep.subr.mxu0 0.0
  %1091 = vmatpush2.msra.mxu0 0.0
  %1092 = vmatprep.subr.mxu0 0.0
  %1093 = vmatpush2.msra.mxu0 0.0
  %1094 = vmatprep.subr.mxu0 0.0
  %1095 = vmatpush2.msra.mxu0 0.0
  %1096 = vmatprep.subr.mxu0 0.0
  %1097 = vmatpush2.msra.mxu0 0.0
  %1098 = vmatprep.subr.mxu0 0.0
  %1099 = vmatpush2.msra.mxu0 0.0
  %1100 = vmatprep.subr.mxu0 0.0
  %1101 = vmatpush2.msra.mxu0 0.0
  %1102 = vmatprep.subr.mxu0 0.0
  %1103 = vmatpush2.msra.mxu0 0.0
  %1104 = vmatprep.subr.mxu0 0.0
  %1105 = vmatpush2.msra.mxu0 0.0
  %1106 = vmatprep.subr.mxu0 0.0
  %1107 = vmatpush2.msra.mxu0 0.0
  %1108 = vmatprep.subr.mxu0 0.0
  %1109 = vmatpush2.msra.mxu0 0.0
  %1110 = vmatprep.subr.mxu0 0.0
  %1111 = vmatpush2.msra.mxu0 0.0
  %1112 = vmatprep.subr.mxu0 0.0
  %1113 = vmatpush2.msra.mxu0 0.0
  %1114 = vmatprep.subr.mxu0 0.0
  %1115 = vmatpush2.msra.mxu0 0.0
  %1116 = vmatprep.subr.mxu0 0.0
  %1117 = vmatpush2.msra.mxu0 0.0
  %1118 = vmatprep.subr.mxu0 0.0
  %1119 = vmatpush2.msra.mxu0 0.0
  %1120 = vmatprep.subr.mxu0 0.0
  %1121 = vmatpush2.msra.mxu0 0.0
  %1122 = vmatprep.mubr.f32.mxu0 0.0
  %1123 = vmatmul.mubr.f32.gmra.mxu0 %v1053
  %v1124 = vpop.f32.mrf.mxu0
  %v1125 = vadd.f32 %v1050, %v1124
  %v1126 = vpop.f32.mrf.mxu0
  %1127 = vmatprep.mubr.f32.mxu0 0.0
  %1128 = vmatmul.mubr.f32.gmra.mxu0 %v1056
  %v1129 = vpop.f32.mrf.mxu0
  %v1130 = vadd.f32 %v1050, %v1129
  %v1131 = vpop.f32.mrf.mxu0
  %1132 = vdwg.mxu0
  %v1133 = vmax.f32 %v1125, 0.0
  %v1134 = vmax.f32 %v1130, 0.0
  %v1135 = vld [vmem:[%s7] sm:$0xff]
  %v1136 = vld [vmem:[%s7 + $0x8] sm:$0xff]
  %v1137 = vld [vmem:[%s8] sm:$0x1]
  %v1139 = vlaneseq
  %v1140 = vshrl.u32 %v1139, 7
  %v1141 = vsub.s32 0, %v1140
  %v1142 = vrot.slane %v1137, %v1141
  %vm1144 = vcmask 130048
  %v1146 = vsel %vm1144, %v1133, 0
  %v1149 = vsel %vm1144, %v1134, 0
  %1151 = vmatprep.subr.mxu0 0.0
  %1152 = vmatpush1.msra.mxu0 0.0
  %1153 = vmatprep.subr.mxu0 0.0
  %1154 = vmatpush1.msra.mxu0 0.0
  %1155 = vmatprep.subr.mxu0 0.0
  %1156 = vmatpush1.msra.mxu0 0.0
  %1157 = vmatprep.subr.mxu0 0.0
  %1158 = vmatpush1.msra.mxu0 0.0
  %1159 = vmatprep.subr.mxu0 0.0
  %1160 = vmatpush1.msra.mxu0 0.0
  %1161 = vmatprep.subr.mxu0 0.0
  %1162 = vmatpush1.msra.mxu0 0.0
  %1163 = vmatprep.subr.mxu0 0.0
  %1164 = vmatpush1.msra.mxu0 0.0
  %1165 = vmatprep.subr.mxu0 0.0
  %1166 = vmatpush1.msra.mxu0 0.0
  %1167 = vmatprep.subr.mxu0 0.0
  %1168 = vmatpush1.msra.mxu0 0.0
  %1169 = vmatprep.subr.mxu0 0.0
  %1170 = vmatpush1.msra.mxu0 0.0
  %1171 = vmatprep.subr.mxu0 0.0
  %1172 = vmatpush1.msra.mxu0 0.0
  %1173 = vmatprep.subr.mxu0 0.0
  %1174 = vmatpush1.msra.mxu0 0.0
  %1175 = vmatprep.subr.mxu0 0.0
  %1176 = vmatpush1.msra.mxu0 0.0
  %1177 = vmatprep.subr.mxu0 0.0
  %1178 = vmatpush1.msra.mxu0 0.0
  %1179 = vmatprep.subr.mxu0 0.0
  %1180 = vmatpush1.msra.mxu0 %v1136
  %1181 = vmatprep.subr.mxu0 0.0
  %1182 = vmatpush1.msra.mxu0 %v1135
  %1183 = vmatprep.subr.mxu0 0.0
  %1184 = vmatpush2.msra.mxu0 0.0
  %1185 = vmatprep.subr.mxu0 0.0
  %1186 = vmatpush2.msra.mxu0 0.0
  %1187 = vmatprep.subr.mxu0 0.0
  %1188 = vmatpush2.msra.mxu0 0.0
  %1189 = vmatprep.subr.mxu0 0.0
  %1190 = vmatpush2.msra.mxu0 0.0
  %1191 = vmatprep.subr.mxu0 0.0
  %1192 = vmatpush2.msra.mxu0 0.0
  %1193 = vmatprep.subr.mxu0 0.0
  %1194 = vmatpush2.msra.mxu0 0.0
  %1195 = vmatprep.subr.mxu0 0.0
  %1196 = vmatpush2.msra.mxu0 0.0
  %1197 = vmatprep.subr.mxu0 0.0
  %1198 = vmatpush2.msra.mxu0 0.0
  %1199 = vmatprep.subr.mxu0 0.0
  %1200 = vmatpush2.msra.mxu0 0.0
  %1201 = vmatprep.subr.mxu0 0.0
  %1202 = vmatpush2.msra.mxu0 0.0
  %1203 = vmatprep.subr.mxu0 0.0
  %1204 = vmatpush2.msra.mxu0 0.0
  %1205 = vmatprep.subr.mxu0 0.0
  %1206 = vmatpush2.msra.mxu0 0.0
  %1207 = vmatprep.subr.mxu0 0.0
  %1208 = vmatpush2.msra.mxu0 0.0
  %1209 = vmatprep.subr.mxu0 0.0
  %1210 = vmatpush2.msra.mxu0 0.0
  %1211 = vmatprep.subr.mxu0 0.0
  %1212 = vmatpush2.msra.mxu0 0.0
  %1213 = vmatprep.subr.mxu0 0.0
  %1214 = vmatpush2.msra.mxu0 0.0
  %1215 = vmatprep.mubr.f32.mxu0 0.0
  %1216 = vmatmul.mubr.f32.gmra.mxu0 %v1146
  %v1217 = vpop.f32.mrf.mxu0
  %v1218 = vadd.f32 %v1142, %v1217
  %v1219 = vpop.f32.mrf.mxu0
  %1220 = vmatprep.mubr.f32.mxu0 0.0
  %1221 = vmatmul.mubr.f32.gmra.mxu0 %v1149
  %v1222 = vpop.f32.mrf.mxu0
  %v1223 = vadd.f32 %v1142, %v1222
  %v1224 = vpop.f32.mrf.mxu0
  %1225 = vdwg.mxu0
  %v1226 = vmax.f32 %v1218, 0.0
  %v1227 = vmax.f32 %v1223, 0.0
  %v1228 = vld [vmem:[%s9] sm:$0xff]
  %v1229 = vld [vmem:[#allocation3] sm:$0x1]
  %v1231 = vlaneseq
  %v1232 = vshrl.u32 %v1231, 7
  %v1233 = vsub.s32 0, %v1232
  %v1234 = vrot.slane %v1229, %v1233
  %vm1236 = vcmask 64512
  %v1238 = vsel %vm1236, %v1226, 0
  %v1241 = vsel %vm1236, %v1227, 0
  %1243 = vmatprep.subr.mxu0 0.0
  %1244 = vmatpush1.msra.mxu0 0.0
  %1245 = vmatprep.subr.mxu0 0.0
  %1246 = vmatpush1.msra.mxu0 0.0
  %1247 = vmatprep.subr.mxu0 0.0
  %1248 = vmatpush1.msra.mxu0 0.0
  %1249 = vmatprep.subr.mxu0 0.0
  %1250 = vmatpush1.msra.mxu0 0.0
  %1251 = vmatprep.subr.mxu0 0.0
  %1252 = vmatpush1.msra.mxu0 0.0
  %1253 = vmatprep.subr.mxu0 0.0
  %1254 = vmatpush1.msra.mxu0 0.0
  %1255 = vmatprep.subr.mxu0 0.0
  %1256 = vmatpush1.msra.mxu0 0.0
  %1257 = vmatprep.subr.mxu0 0.0
  %1258 = vmatpush1.msra.mxu0 0.0
  %1259 = vmatprep.subr.mxu0 0.0
  %1260 = vmatpush1.msra.mxu0 0.0
  %1261 = vmatprep.subr.mxu0 0.0
  %1262 = vmatpush1.msra.mxu0 0.0
  %1263 = vmatprep.subr.mxu0 0.0
  %1264 = vmatpush1.msra.mxu0 0.0
  %1265 = vmatprep.subr.mxu0 0.0
  %1266 = vmatpush1.msra.mxu0 0.0
  %1267 = vmatprep.subr.mxu0 0.0
  %1268 = vmatpush1.msra.mxu0 0.0
  %1269 = vmatprep.subr.mxu0 0.0
  %1270 = vmatpush1.msra.mxu0 0.0
  %1271 = vmatprep.subr.mxu0 0.0
  %1272 = vmatpush1.msra.mxu0 0.0
  %1273 = vmatprep.subr.mxu0 0.0
  %1274 = vmatpush1.msra.mxu0 %v1228
  %1275 = vmatprep.subr.mxu0 0.0
  %1276 = vmatpush2.msra.mxu0 0.0
  %1277 = vmatprep.subr.mxu0 0.0
  %1278 = vmatpush2.msra.mxu0 0.0
  %1279 = vmatprep.subr.mxu0 0.0
  %1280 = vmatpush2.msra.mxu0 0.0
  %1281 = vmatprep.subr.mxu0 0.0
  %1282 = vmatpush2.msra.mxu0 0.0
  %1283 = vmatprep.subr.mxu0 0.0
  %1284 = vmatpush2.msra.mxu0 0.0
  %1285 = vmatprep.subr.mxu0 0.0
  %1286 = vmatpush2.msra.mxu0 0.0
  %1287 = vmatprep.subr.mxu0 0.0
  %1288 = vmatpush2.msra.mxu0 0.0
  %1289 = vmatprep.subr.mxu0 0.0
  %1290 = vmatpush2.msra.mxu0 0.0
  %1291 = vmatprep.subr.mxu0 0.0
  %1292 = vmatpush2.msra.mxu0 0.0
  %1293 = vmatprep.subr.mxu0 0.0
  %1294 = vmatpush2.msra.mxu0 0.0
  %1295 = vmatprep.subr.mxu0 0.0
  %1296 = vmatpush2.msra.mxu0 0.0
  %1297 = vmatprep.subr.mxu0 0.0
  %1298 = vmatpush2.msra.mxu0 0.0
  %1299 = vmatprep.subr.mxu0 0.0
  %1300 = vmatpush2.msra.mxu0 0.0
  %1301 = vmatprep.subr.mxu0 0.0
  %1302 = vmatpush2.msra.mxu0 0.0
  %1303 = vmatprep.subr.mxu0 0.0
  %1304 = vmatpush2.msra.mxu0 0.0
  %1305 = vmatprep.subr.mxu0 0.0
  %1306 = vmatpush2.msra.mxu0 0.0
  %1307 = vmatprep.mubr.f32.mxu0 0.0
  %1308 = vmatmul.mubr.f32.gmra.mxu0 %v1238
  %v1309 = vpop.f32.mrf.mxu0
  %v1310 = vadd.f32 %v1234, %v1309
  %v1311 = vpop.f32.mrf.mxu0
  %1312 = vmatprep.mubr.f32.mxu0 0.0
  %1313 = vmatmul.mubr.f32.gmra.mxu0 %v1241
  %v1314 = vpop.f32.mrf.mxu0
  %v1315 = vadd.f32 %v1234, %v1314
  %v1316 = vpop.f32.mrf.mxu0
  %1317 = vdwg.mxu0
  %vm1318 = vcmask 7168
  %1319 = vst.msk [vmem:[%s11] sm:$0xff] %vm1318, %v1310
  %1320 = vst.msk [vmem:[%s11 + $0x8] sm:$0xff] %vm1318, %v1315
  // Predicated region
  $region46: #{tpu_custom_call.1} parent=0 // pred_check
    _
  $region47: #{tpu_custom_call.1} parent=0 // pred_check_branch
    %1322 = sbr.rel (0) target = $region49
  $region48: #{tpu_custom_call.1} parent=0 // pred_region
    _
  $region49: #{tpu_custom_call.1} parent=0 // pred_fallthru
    _
  // Predicated region
  $region50: #{tpu_custom_call.1} parent=0 // pred_check
    _
  $region51: #{tpu_custom_call.1} parent=0 // pred_check_branch
    %1324 = sbr.rel (0) target = $region53
  $region52: #{tpu_custom_call.1} parent=0 // pred_region
    _
  $region53: #{tpu_custom_call.1} parent=0 // pred_fallthru
    _

</llo_original>
